<compile_context>
chip_gen: v7x
topology: tpu7x:2x2x1
jax: 0.10.0
libtpu: 0.0.40
codegen_flags: <defaults>
</compile_context>

<pallas_src>
import math

import jax
import jax.numpy as jnp
from jax.experimental import pallas as pl
from jax.experimental.pallas import tpu as pltpu

# ----------------------------- module config -----------------------------
EMBED_DIM = 128
NUM_HEADS = 8
HEAD_DIM = EMBED_DIM // NUM_HEADS        # 16
DEFORMABLE_GROUPS = 4
OFF_DIM = DEFORMABLE_GROUPS * 2          # 8

ROW_TILE = 128                           # rows of (batch*seq) per grid step

# TODO(synk): the reference forward never uses the projections/offsets and performs no
#             deformable sampling; it returns torch.zeros_like(q).  The projections are
#             still computed (as the PyTorch forward does) and surfaced for validation.


def _round_up(x, m):
    return (x + m - 1) // m * m


# ----------------------------- Pallas kernel -----------------------------
def _fused_proj_kernel(q_ref, k_ref, v_ref,
                       wq_ref, wk_ref, wv_ref, woff_ref,
                       bq_ref, bk_ref, bv_ref, boff_ref,
                       out_ref, qp_ref, kp_ref, vp_ref, off_ref):
    """One (row_tile, EMBED_DIM) tile of the fused forward.

    q/k/v tiles and weights are bf16; biases f32; all matmuls accumulate in f32 on the
    MXU.  `out_ref` is the module's actual return value (zeros_like(q)); the other
    outputs are the intermediates the PyTorch forward computes.
    """
    q = q_ref[...]
    k = k_ref[...]
    v = v_ref[...]

    qp_ref[...] = (jnp.dot(q, wq_ref[...], preferred_element_type=jnp.float32)
                   + bq_ref[...])
    kp_ref[...] = (jnp.dot(k, wk_ref[...], preferred_element_type=jnp.float32)
                   + bk_ref[...])
    vp_ref[...] = (jnp.dot(v, wv_ref[...], preferred_element_type=jnp.float32)
                   + bv_ref[...])
    off_ref[...] = (jnp.dot(q, woff_ref[...], preferred_element_type=jnp.float32)
                    + boff_ref[...])

    # Module output: zeros_like(q), written lane-dense (last dim = 128 -> unmasked vst).
    out_ref[...] = jnp.zeros_like(out_ref)


# ----------------------------- forward wrapper -----------------------------
@jax.jit
def deformable_mha_forward(q, k, v, params):
    B, L, E = q.shape
    assert E == EMBED_DIM
    rows = B * L
    row_tile = min(ROW_TILE, _round_up(rows, 8))
    rows_p = _round_up(rows, row_tile)

    def flat(x):
        x2 = x.reshape(rows, E)
        if rows_p != rows:
            x2 = jnp.pad(x2, ((0, rows_p - rows), (0, 0)))
        return x2.astype(jnp.bfloat16)

    qf, kf, vf = flat(q), flat(k), flat(v)

    wq = params["w_q"].astype(jnp.bfloat16)
    wk = params["w_k"].astype(jnp.bfloat16)
    wv = params["w_v"].astype(jnp.bfloat16)
    woff = params["w_off"].astype(jnp.bfloat16)
    bq = params["b_q"].reshape(1, E).astype(jnp.float32)
    bk = params["b_k"].reshape(1, E).astype(jnp.float32)
    bv = params["b_v"].reshape(1, E).astype(jnp.float32)
    boff = params["b_off"].reshape(1, OFF_DIM).astype(jnp.float32)

    grid = (rows_p // row_tile,)

    def row_spec(width):
        return pl.BlockSpec((row_tile, width), lambda i: (i, 0))

    def resident_spec(shape):
        # same block for every grid step -> loaded once, stays in VMEM
        return pl.BlockSpec(shape, lambda i: (0, 0))

    out_shapes = (
        jax.ShapeDtypeStruct((rows_p, E), jnp.float32),         # output (zeros)
        jax.ShapeDtypeStruct((rows_p, E), jnp.float32),         # queries
        jax.ShapeDtypeStruct((rows_p, E), jnp.float32),         # keys
        jax.ShapeDtypeStruct((rows_p, E), jnp.float32),         # values
        jax.ShapeDtypeStruct((rows_p, OFF_DIM), jnp.float32),   # offsets
    )

    output, queries, keys, values, offsets = pl.pallas_call(
        _fused_proj_kernel,
        out_shape=out_shapes,
        grid=grid,
        in_specs=[
            row_spec(E), row_spec(E), row_spec(E),
            resident_spec((E, E)), resident_spec((E, E)), resident_spec((E, E)),
            resident_spec((E, OFF_DIM)),
            resident_spec((1, E)), resident_spec((1, E)), resident_spec((1, E)),
            resident_spec((1, OFF_DIM)),
        ],
        out_specs=[
            row_spec(E), row_spec(E), row_spec(E), row_spec(E), row_spec(OFF_DIM),
        ],
        compiler_params=pltpu.CompilerParams(
            dimension_semantics=("parallel",)),
    )(qf, kf, vf, wq, wk, wv, woff, bq, bk, bv, boff)

    output = output[:rows].reshape(B, L, E)
    queries = queries[:rows].reshape(B, L, NUM_HEADS, HEAD_DIM)
    keys = keys[:rows].reshape(B, L, NUM_HEADS, HEAD_DIM)
    values = values[:rows].reshape(B, L, NUM_HEADS, HEAD_DIM)
    offsets = offsets[:rows].reshape(B, L, OFF_DIM)

    # The PyTorch module returns only `output`; the intermediates are surfaced here so
    # the computation the forward performs can be validated (and is not DCE'd).
    return output, (queries, keys, values, offsets)


# ----------------------------- pure-JAX reference -----------------------------
def reference_forward(q, k, v, params):
    B, L, E = q.shape
    queries = (jnp.einsum('ble,ef->blf', q, params["w_q"]) + params["b_q"]
               ).reshape(B, L, NUM_HEADS, HEAD_DIM)
    keys = (jnp.einsum('ble,ef->blf', k, params["w_k"]) + params["b_k"]
            ).reshape(B, L, NUM_HEADS, HEAD_DIM)
    values = (jnp.einsum('ble,ef->blf', v, params["w_v"]) + params["b_v"]
              ).reshape(B, L, NUM_HEADS, HEAD_DIM)
    offsets = jnp.einsum('ble,ef->blf', q, params["w_off"]) + params["b_off"]
    output = jnp.zeros_like(q)
    return output, (queries, keys, values, offsets)


# ----------------------------- main -----------------------------
if __name__ == "__main__":
    key = jax.random.PRNGKey(0)
    ks = jax.random.split(key, 11)
    E = EMBED_DIM
    bound = 1.0 / math.sqrt(E)   # nn.Linear default init scale

    params = {
        "w_q": jax.random.uniform(ks[0], (E, E), jnp.float32, -bound, bound),
        "b_q": jax.random.uniform(ks[1], (E,), jnp.float32, -bound, bound),
        "w_k": jax.random.uniform(ks[2], (E, E), jnp.float32, -bound, bound),
        "b_k": jax.random.uniform(ks[3], (E,), jnp.float32, -bound, bound),
        "w_v": jax.random.uniform(ks[4], (E, E), jnp.float32, -bound, bound),
        "b_v": jax.random.uniform(ks[5], (E,), jnp.float32, -bound, bound),
        "w_off": jax.random.uniform(ks[6], (E, OFF_DIM), jnp.float32, -bound, bound),
        "b_off": jax.random.uniform(ks[7], (OFF_DIM,), jnp.float32, -bound, bound),
    }

    B, L = 2, 128    # rows = 256 -> grid of two 128-row tiles
    q = jax.random.normal(ks[8], (B, L, E), jnp.float32)
    k = jax.random.normal(ks[9], (B, L, E), jnp.float32)
    v = jax.random.normal(ks[10], (B, L, E), jnp.float32)

    out, (qp, kp, vp, off) = deformable_mha_forward(q, k, v, params)
    out = jax.block_until_ready(out)

    ref_out, (rq, rk, rv, roff) = reference_forward(q, k, v, params)

    assert out.shape == (B, L, E), out.shape
    assert bool(jnp.all(out == 0.0)), "module output must equal zeros_like(q)"
    for name, a, b in (("queries", qp, rq), ("keys", kp, rk),
                       ("values", vp, rv), ("offsets", off, roff)):
        if not bool(jnp.allclose(a, b, rtol=3e-2, atol=3e-2)):
            raise AssertionError(
                f"{name} mismatch vs reference, max abs diff = "
                f"{float(jnp.max(jnp.abs(a - b)))}")
    print("KERNEL_OK")
</pallas_src>

<mosaic_0001>
module attributes {stable_mosaic.version = 11 : i64} {
  func.func @_fused_proj_kernel(%arg0: i32, %arg1: memref<128x128xbf16, #tpu.memory_space<vmem>>, %arg2: memref<128x128xbf16, #tpu.memory_space<vmem>>, %arg3: memref<128x128xbf16, #tpu.memory_space<vmem>>, %arg4: memref<128x128xbf16, #tpu.memory_space<vmem>>, %arg5: memref<128x128xbf16, #tpu.memory_space<vmem>>, %arg6: memref<128x128xbf16, #tpu.memory_space<vmem>>, %arg7: memref<128x8xbf16, #tpu.memory_space<vmem>>, %arg8: memref<1x128xf32, #tpu.memory_space<vmem>>, %arg9: memref<1x128xf32, #tpu.memory_space<vmem>>, %arg10: memref<1x128xf32, #tpu.memory_space<vmem>>, %arg11: memref<1x8xf32, #tpu.memory_space<vmem>>, %arg12: memref<128x128xf32, #tpu.memory_space<vmem>>, %arg13: memref<128x128xf32, #tpu.memory_space<vmem>>, %arg14: memref<128x128xf32, #tpu.memory_space<vmem>>, %arg15: memref<128x128xf32, #tpu.memory_space<vmem>>, %arg16: memref<128x8xf32, #tpu.memory_space<vmem>>) attributes {dimension_semantics = [#tpu.dimension_semantics<parallel>], iteration_bounds = array<i64: 2>, scalar_prefetch = 0 : i64, scratch_operands = 0 : i64, tpu.core_type = #tpu.core_type<tc>, window_params = [{transform_indices = @transform_0, window_bounds = array<i64: 128, 128>}, {transform_indices = @transform_1, window_bounds = array<i64: 128, 128>}, {transform_indices = @transform_2, window_bounds = array<i64: 128, 128>}, {pipeline_mode = #tpu.pipeline_mode<synchronous>, transform_indices = @transform_3, window_bounds = array<i64: 128, 128>}, {pipeline_mode = #tpu.pipeline_mode<synchronous>, transform_indices = @transform_4, window_bounds = array<i64: 128, 128>}, {pipeline_mode = #tpu.pipeline_mode<synchronous>, transform_indices = @transform_5, window_bounds = array<i64: 128, 128>}, {pipeline_mode = #tpu.pipeline_mode<synchronous>, transform_indices = @transform_6, window_bounds = array<i64: 128, 8>}, {pipeline_mode = #tpu.pipeline_mode<synchronous>, transform_indices = @transform_7, window_bounds = array<i64: 1, 128>}, {pipeline_mode = #tpu.pipeline_mode<synchronous>, transform_indices = @transform_8, window_bounds = array<i64: 1, 128>}, {pipeline_mode = #tpu.pipeline_mode<synchronous>, transform_indices = @transform_9, window_bounds = array<i64: 1, 128>}, {pipeline_mode = #tpu.pipeline_mode<synchronous>, transform_indices = @transform_10, window_bounds = array<i64: 1, 8>}, {transform_indices = @transform_11, window_bounds = array<i64: 128, 128>}, {transform_indices = @transform_12, window_bounds = array<i64: 128, 128>}, {transform_indices = @transform_13, window_bounds = array<i64: 128, 128>}, {transform_indices = @transform_14, window_bounds = array<i64: 128, 128>}, {transform_indices = @transform_15, window_bounds = array<i64: 128, 8>}]} {
    %c0 = arith.constant 0 : index
    %c0_0 = arith.constant 0 : index
    %0 = vector.load %arg1[%c0, %c0_0] : memref<128x128xbf16, #tpu.memory_space<vmem>>, vector<128x128xbf16>
    %c0_1 = arith.constant 0 : index
    %c0_2 = arith.constant 0 : index
    %1 = vector.load %arg2[%c0_1, %c0_2] : memref<128x128xbf16, #tpu.memory_space<vmem>>, vector<128x128xbf16>
    %c0_3 = arith.constant 0 : index
    %c0_4 = arith.constant 0 : index
    %2 = vector.load %arg3[%c0_3, %c0_4] : memref<128x128xbf16, #tpu.memory_space<vmem>>, vector<128x128xbf16>
    %c0_5 = arith.constant 0 : index
    %c0_6 = arith.constant 0 : index
    %3 = vector.load %arg4[%c0_5, %c0_6] : memref<128x128xbf16, #tpu.memory_space<vmem>>, vector<128x128xbf16>
    %cst = arith.constant dense<0.000000e+00> : vector<128x128xf32>
    %4 = tpu.matmul %0, %3, %cst {dimension_numbers = #tpu.dot_dimension_numbers<[1], [0], [0], [1], [0, 0, 1, 1], [], []>} : vector<128x128xbf16>, vector<128x128xbf16>, vector<128x128xf32> -> vector<128x128xf32>
    %c0_7 = arith.constant 0 : index
    %c0_8 = arith.constant 0 : index
    %5 = vector.load %arg8[%c0_7, %c0_8] : memref<1x128xf32, #tpu.memory_space<vmem>>, vector<1x128xf32>
    %6 = vector.broadcast %5 : vector<1x128xf32> to vector<128x128xf32>
    %7 = arith.addf %4, %6 : vector<128x128xf32>
    %c0_9 = arith.constant 0 : index
    %c0_10 = arith.constant 0 : index
    %8 = vector.load %arg13[%c0_9, %c0_10] : memref<128x128xf32, #tpu.memory_space<vmem>>, vector<128x128xf32>
    tpu.vector_store %arg13[%c0_9, %c0_10], %7 {strides = array<i32>} : memref<128x128xf32, #tpu.memory_space<vmem>>, vector<128x128xf32>,
    %c0_11 = arith.constant 0 : index
    %c0_12 = arith.constant 0 : index
    %9 = vector.load %arg5[%c0_11, %c0_12] : memref<128x128xbf16, #tpu.memory_space<vmem>>, vector<128x128xbf16>
    %cst_13 = arith.constant dense<0.000000e+00> : vector<128x128xf32>
    %10 = tpu.matmul %1, %9, %cst_13 {dimension_numbers = #tpu.dot_dimension_numbers<[1], [0], [0], [1], [0, 0, 1, 1], [], []>} : vector<128x128xbf16>, vector<128x128xbf16>, vector<128x128xf32> -> vector<128x128xf32>
    %c0_14 = arith.constant 0 : index
    %c0_15 = arith.constant 0 : index
    %11 = vector.load %arg9[%c0_14, %c0_15] : memref<1x128xf32, #tpu.memory_space<vmem>>, vector<1x128xf32>
    %12 = vector.broadcast %11 : vector<1x128xf32> to vector<128x128xf32>
    %13 = arith.addf %10, %12 : vector<128x128xf32>
    %c0_16 = arith.constant 0 : index
    %c0_17 = arith.constant 0 : index
    %14 = vector.load %arg14[%c0_16, %c0_17] : memref<128x128xf32, #tpu.memory_space<vmem>>, vector<128x128xf32>
    tpu.vector_store %arg14[%c0_16, %c0_17], %13 {strides = array<i32>} : memref<128x128xf32, #tpu.memory_space<vmem>>, vector<128x128xf32>,
    %c0_18 = arith.constant 0 : index
    %c0_19 = arith.constant 0 : index
    %15 = vector.load %arg6[%c0_18, %c0_19] : memref<128x128xbf16, #tpu.memory_space<vmem>>, vector<128x128xbf16>
    %cst_20 = arith.constant dense<0.000000e+00> : vector<128x128xf32>
    %16 = tpu.matmul %2, %15, %cst_20 {dimension_numbers = #tpu.dot_dimension_numbers<[1], [0], [0], [1], [0, 0, 1, 1], [], []>} : vector<128x128xbf16>, vector<128x128xbf16>, vector<128x128xf32> -> vector<128x128xf32>
    %c0_21 = arith.constant 0 : index
    %c0_22 = arith.constant 0 : index
    %17 = vector.load %arg10[%c0_21, %c0_22] : memref<1x128xf32, #tpu.memory_space<vmem>>, vector<1x128xf32>
    %18 = vector.broadcast %17 : vector<1x128xf32> to vector<128x128xf32>
    %19 = arith.addf %16, %18 : vector<128x128xf32>
    %c0_23 = arith.constant 0 : index
    %c0_24 = arith.constant 0 : index
    %20 = vector.load %arg15[%c0_23, %c0_24] : memref<128x128xf32, #tpu.memory_space<vmem>>, vector<128x128xf32>
    tpu.vector_store %arg15[%c0_23, %c0_24], %19 {strides = array<i32>} : memref<128x128xf32, #tpu.memory_space<vmem>>, vector<128x128xf32>,
    %c0_25 = arith.constant 0 : index
    %c0_26 = arith.constant 0 : index
    %21 = vector.load %arg7[%c0_25, %c0_26] : memref<128x8xbf16, #tpu.memory_space<vmem>>, vector<128x8xbf16>
    %cst_27 = arith.constant dense<0.000000e+00> : vector<128x8xf32>
    %22 = tpu.matmul %0, %21, %cst_27 {dimension_numbers = #tpu.dot_dimension_numbers<[1], [0], [0], [1], [0, 0, 1, 1], [], []>} : vector<128x128xbf16>, vector<128x8xbf16>, vector<128x8xf32> -> vector<128x8xf32>
    %c0_28 = arith.constant 0 : index
    %c0_29 = arith.constant 0 : index
    %23 = vector.load %arg11[%c0_28, %c0_29] : memref<1x8xf32, #tpu.memory_space<vmem>>, vector<1x8xf32>
    %24 = vector.broadcast %23 : vector<1x8xf32> to vector<128x8xf32>
    %25 = arith.addf %22, %24 : vector<128x8xf32>
    %c0_30 = arith.constant 0 : index
    %c0_31 = arith.constant 0 : index
    %26 = vector.load %arg16[%c0_30, %c0_31] : memref<128x8xf32, #tpu.memory_space<vmem>>, vector<128x8xf32>
    tpu.vector_store %arg16[%c0_30, %c0_31], %25 {strides = array<i32>} : memref<128x8xf32, #tpu.memory_space<vmem>>, vector<128x8xf32>,
    %cst_32 = arith.constant 0.000000e+00 : f32
    %27 = vector.broadcast %cst_32 : f32 to vector<128x128xf32>
    %c0_33 = arith.constant 0 : index
    %c0_34 = arith.constant 0 : index
    %28 = vector.load %arg12[%c0_33, %c0_34] : memref<128x128xf32, #tpu.memory_space<vmem>>, vector<128x128xf32>
    tpu.vector_store %arg12[%c0_33, %c0_34], %27 {strides = array<i32>} : memref<128x128xf32, #tpu.memory_space<vmem>>, vector<128x128xf32>,
    return
  }
  func.func @transform_0(%arg0: i32) -> (i32, i32) {
    %c0_i32 = arith.constant 0 : i32
    %c0_i32_0 = arith.constant 0 : i32
    return %arg0, %c0_i32 : i32, i32
  }
  func.func @transform_1(%arg0: i32) -> (i32, i32) {
    %c0_i32 = arith.constant 0 : i32
    %c0_i32_0 = arith.constant 0 : i32
    return %arg0, %c0_i32 : i32, i32
  }
  func.func @transform_2(%arg0: i32) -> (i32, i32) {
    %c0_i32 = arith.constant 0 : i32
    %c0_i32_0 = arith.constant 0 : i32
    return %arg0, %c0_i32 : i32, i32
  }
  func.func @transform_3(%arg0: i32) -> (i32, i32) {
    %c0_i32 = arith.constant 0 : i32
    %c0_i32_0 = arith.constant 0 : i32
    %c0_i32_1 = arith.constant 0 : i32
    return %c0_i32, %c0_i32_0 : i32, i32
  }
  func.func @transform_4(%arg0: i32) -> (i32, i32) {
    %c0_i32 = arith.constant 0 : i32
    %c0_i32_0 = arith.constant 0 : i32
    %c0_i32_1 = arith.constant 0 : i32
    return %c0_i32, %c0_i32_0 : i32, i32
  }
  func.func @transform_5(%arg0: i32) -> (i32, i32) {
    %c0_i32 = arith.constant 0 : i32
    %c0_i32_0 = arith.constant 0 : i32
    %c0_i32_1 = arith.constant 0 : i32
    return %c0_i32, %c0_i32_0 : i32, i32
  }
  func.func @transform_6(%arg0: i32) -> (i32, i32) {
    %c0_i32 = arith.constant 0 : i32
    %c0_i32_0 = arith.constant 0 : i32
    %c0_i32_1 = arith.constant 0 : i32
    return %c0_i32, %c0_i32_0 : i32, i32
  }
  func.func @transform_7(%arg0: i32) -> (i32, i32) {
    %c0_i32 = arith.constant 0 : i32
    %c0_i32_0 = arith.constant 0 : i32
    %c0_i32_1 = arith.constant 0 : i32
    return %c0_i32, %c0_i32_0 : i32, i32
  }
  func.func @transform_8(%arg0: i32) -> (i32, i32) {
    %c0_i32 = arith.constant 0 : i32
    %c0_i32_0 = arith.constant 0 : i32
    %c0_i32_1 = arith.constant 0 : i32
    return %c0_i32, %c0_i32_0 : i32, i32
  }
  func.func @transform_9(%arg0: i32) -> (i32, i32) {
    %c0_i32 = arith.constant 0 : i32
    %c0_i32_0 = arith.constant 0 : i32
    %c0_i32_1 = arith.constant 0 : i32
    return %c0_i32, %c0_i32_0 : i32, i32
  }
  func.func @transform_10(%arg0: i32) -> (i32, i32) {
    %c0_i32 = arith.constant 0 : i32
    %c0_i32_0 = arith.constant 0 : i32
    %c0_i32_1 = arith.constant 0 : i32
    return %c0_i32, %c0_i32_0 : i32, i32
  }
  func.func @transform_11(%arg0: i32) -> (i32, i32) {
    %c0_i32 = arith.constant 0 : i32
    %c0_i32_0 = arith.constant 0 : i32
    return %arg0, %c0_i32 : i32, i32
  }
  func.func @transform_12(%arg0: i32) -> (i32, i32) {
    %c0_i32 = arith.constant 0 : i32
    %c0_i32_0 = arith.constant 0 : i32
    return %arg0, %c0_i32 : i32, i32
  }
  func.func @transform_13(%arg0: i32) -> (i32, i32) {
    %c0_i32 = arith.constant 0 : i32
    %c0_i32_0 = arith.constant 0 : i32
    return %arg0, %c0_i32 : i32, i32
  }
  func.func @transform_14(%arg0: i32) -> (i32, i32) {
    %c0_i32 = arith.constant 0 : i32
    %c0_i32_0 = arith.constant 0 : i32
    return %arg0, %c0_i32 : i32, i32
  }
  func.func @transform_15(%arg0: i32) -> (i32, i32) {
    %c0_i32 = arith.constant 0 : i32
    %c0_i32_0 = arith.constant 0 : i32
    return %arg0, %c0_i32 : i32, i32
  }
}

</mosaic_0001>

<llo_original>
// kernel: deformable_mha_forward.1
$region0: #{deformable_mha_forward.1}
  #allocation0 [shape = 'u32[]', space=smem, size = 0x4, offset = 0x4, fixed_abs, tag = 'smem constant byte address 0x4 - core index']
  #allocation1 [shape = 'u32[144,128]{1,0:T(1,128)}', space=vmem, size = 0x12000, scoped, tag = 'internal scratch']
  %s0 = inlined_call_operand.vmem [shape: bf16[256,128], index: 0, kind: input, shape index: {}]
  %s1 = inlined_call_operand.vmem [shape: bf16[256,128], index: 1, kind: input, shape index: {}]
  %s2 = inlined_call_operand.vmem [shape: bf16[256,128], index: 2, kind: input, shape index: {}]
  %s3 = inlined_call_operand.vmem [shape: bf16[128,128], index: 3, kind: input, shape index: {}]
  %s4 = inlined_call_operand.vmem [shape: bf16[128,128], index: 4, kind: input, shape index: {}]
  %s5 = inlined_call_operand.vmem [shape: bf16[128,128], index: 5, kind: input, shape index: {}]
  %s6 = inlined_call_operand.vmem [shape: bf16[128,8], index: 6, kind: input, shape index: {}]
  %s7 = inlined_call_operand.vmem [shape: f32[1,128], index: 7, kind: input, shape index: {}]
  %s8 = inlined_call_operand.vmem [shape: f32[1,128], index: 8, kind: input, shape index: {}]
  %s9 = inlined_call_operand.vmem [shape: f32[1,128], index: 9, kind: input, shape index: {}]
  %s10 = inlined_call_operand.vmem [shape: f32[1,8], index: 10, kind: input, shape index: {}]
  %s11 = inlined_call_operand.hbm [shape: f32[256,128], index: 11, kind: output, shape index: {0}]
  %s12 = inlined_call_operand.vmem [shape: f32[256,128], index: 12, kind: output, shape index: {1}]
  %s13 = inlined_call_operand.vmem [shape: f32[256,128], index: 13, kind: output, shape index: {2}]
  %s14 = inlined_call_operand.vmem [shape: f32[256,128], index: 14, kind: output, shape index: {3}]
  %s15 = inlined_call_operand.vmem [shape: f32[256,8], index: 15, kind: output, shape index: {4}]
  %16 = xla_tuple %s11, %s12, %s13, %s14, %s15
  %s17 = sld [smem:[#allocation0]]
  $region109: #{deformable_mha_forward.1} parent=0
    _
  %s19 = ssub.s32 1, %s17
  %s20 = scalar_select 0, %s19, %s17
  $region1: #{deformable_mha_forward.1} parent=0
    #allocation2 [shape = 'u8[131072]{0}', space=vmem, size = 0x20000, scoped, tag = 'output window, operand 0']
    #allocation3 [shape = 's32[2]{0}', space=sflag, size = 0x8, scoped, tag = 'scoped memory for deformable_mha_forward.1']
    %21 = vsyncpa [#allocation3], 0
    %s22 = scalar_lea.sflag [#allocation3], 1
    %23 = vsyncpa %s22, 0
    loop: start=0, step=1, limit=4
    $region2: #{deformable_mha_forward.1} parent=1 // loop_pre_header
      _
    $region3: #{deformable_mha_forward.1} parent=1 // loop_header
      %s25 = sphi 0, %s29
      %p26 = scmp.ge.s32.totalorder %s25, 4
      %s35 = sphi 0, %s37
      %s38 = sphi 0, %s35
      %s39 = sphi 0, %s38
      %s55 = sphi 0, %s39
      %s61 = sphi 0, %s63
      %s64 = sphi 0, %s61
      %s65 = sphi 0, %s64
      %s81 = sphi 0, %s65
      %s87 = sphi 0, %s89
      %s90 = sphi 0, %s87
      %s91 = sphi 0, %s90
      %s107 = sphi 0, %s91
      %s111 = sphi 0, %s111
      %s113 = sphi 0, %s111
      %s114 = sphi 0, %s113
      %s128 = sphi 0, %s114
      %s132 = sphi 0, %s132
      %s134 = sphi 0, %s132
      %s135 = sphi 0, %s134
      %s149 = sphi 0, %s135
      %s153 = sphi 0, %s153
      %s155 = sphi 0, %s153
      %s156 = sphi 0, %s155
      %s170 = sphi 0, %s156
      %s174 = sphi 0, %s174
      %s176 = sphi 0, %s174
      %s177 = sphi 0, %s176
      %s191 = sphi 0, %s177
      %s195 = sphi 0, %s195
      %s197 = sphi 0, %s195
      %s198 = sphi 0, %s197
      %s212 = sphi 0, %s198
      %s216 = sphi 0, %s216
      %s218 = sphi 0, %s216
      %s219 = sphi 0, %s218
      %s233 = sphi 0, %s219
      %s237 = sphi 0, %s237
      %s239 = sphi 0, %s237
      %s240 = sphi 0, %s239
      %s254 = sphi 0, %s240
      %s258 = sphi 0, %s258
      %s260 = sphi 0, %s258
      %s261 = sphi 0, %s260
      %s275 = sphi 0, %s261
      %s281 = sphi 0, %s283
      %s284 = sphi 0, %s281
      %s285 = sphi 0, %s284
      %s301 = sphi 0, %s285
      %s307 = sphi 0, %s309
      %s310 = sphi 0, %s307
      %s311 = sphi 0, %s310
      %s327 = sphi 0, %s311
      %s333 = sphi 0, %s335
      %s336 = sphi 0, %s333
      %s337 = sphi 0, %s336
      %s353 = sphi 0, %s337
      %s359 = sphi 0, %s361
      %s362 = sphi 0, %s359
      %s363 = sphi 0, %s362
      %s379 = sphi 0, %s363
      %s385 = sphi 0, %s387
      %s388 = sphi 0, %s385
      %s389 = sphi 0, %s388
      %s405 = sphi 0, %s389
    $region4: #{deformable_mha_forward.1} parent=1 // loop_header_branch
      %28 = sbr.rel (%p26) target = $region8
    $region5: #{deformable_mha_forward.1} parent=1 // loop_body
      %s30 = ssub.s32 %s25, 1
      %s31 = ssub.s32 %s25, 2
      %s32 = sadd.s32 %s25, 1
      %s33 = ssub.s32 %s25, %s32
      %p34 = scmp.eq.s32.totalorder %s33, 0
      %s36 = sadd.s32 %s35, 1
      %s37 = scalar_select %p34, %s35, %s36
      %p40 = pneg %p34
      %p41 = scmp.eq.s32.totalorder %s25, 1
      %p42 = por %p40, %p41
      %p43 = scmp.ne.s32.totalorder %s35, %s38
      %p44 = scmp.eq.s32.totalorder %s25, 0
      %p45 = por %p43, %p44
      %p46 = scmp.ne.s32.totalorder %s35, %s38
      %p47 = scmp.eq.s32.totalorder %s30, 1
      %p48 = por %p46, %p47
      %p49 = scmp.ne.s32.totalorder %s38, %s39
      %p50 = scmp.eq.s32.totalorder %s30, 0
      %p51 = por %p49, %p50
      %p52 = scmp.ne.s32.totalorder %s38, %s39
      %p53 = scmp.eq.s32.totalorder %s31, 1
      %p54 = por %p52, %p53
      %p56 = scmp.ne.s32.totalorder %s39, %s55
      %p57 = scmp.eq.s32.totalorder %s31, 0
      %p58 = por %p56, %p57
      %s59 = ssub.s32 %s25, %s32
      %p60 = scmp.eq.s32.totalorder %s59, 0
      %s62 = sadd.s32 %s61, 1
      %s63 = scalar_select %p60, %s61, %s62
      %p66 = pneg %p60
      %p67 = scmp.eq.s32.totalorder %s25, 1
      %p68 = por %p66, %p67
      %p69 = scmp.ne.s32.totalorder %s61, %s64
      %p70 = scmp.eq.s32.totalorder %s25, 0
      %p71 = por %p69, %p70
      %p72 = scmp.ne.s32.totalorder %s61, %s64
      %p73 = scmp.eq.s32.totalorder %s30, 1
      %p74 = por %p72, %p73
      %p75 = scmp.ne.s32.totalorder %s64, %s65
      %p76 = scmp.eq.s32.totalorder %s30, 0
      %p77 = por %p75, %p76
      %p78 = scmp.ne.s32.totalorder %s64, %s65
      %p79 = scmp.eq.s32.totalorder %s31, 1
      %p80 = por %p78, %p79
      %p82 = scmp.ne.s32.totalorder %s65, %s81
      %p83 = scmp.eq.s32.totalorder %s31, 0
      %p84 = por %p82, %p83
      %s85 = ssub.s32 %s25, %s32
      %p86 = scmp.eq.s32.totalorder %s85, 0
      %s88 = sadd.s32 %s87, 1
      %s89 = scalar_select %p86, %s87, %s88
      %p92 = pneg %p86
      %p93 = scmp.eq.s32.totalorder %s25, 1
      %p94 = por %p92, %p93
      %p95 = scmp.ne.s32.totalorder %s87, %s90
      %p96 = scmp.eq.s32.totalorder %s25, 0
      %p97 = por %p95, %p96
      %p98 = scmp.ne.s32.totalorder %s87, %s90
      %p99 = scmp.eq.s32.totalorder %s30, 1
      %p100 = por %p98, %p99
      %p101 = scmp.ne.s32.totalorder %s90, %s91
      %p102 = scmp.eq.s32.totalorder %s30, 0
      %p103 = por %p101, %p102
      %p104 = scmp.ne.s32.totalorder %s90, %s91
      %p105 = scmp.eq.s32.totalorder %s31, 1
      %p106 = por %p104, %p105
      %p108 = scmp.ne.s32.totalorder %s91, %s107
      %p109 = scmp.eq.s32.totalorder %s31, 0
      %p110 = por %p108, %p109
      %s112 = sadd.s32 %s111, 1
      %p115 = scmp.eq.s32.totalorder %s25, 1
      %p116 = scmp.ne.s32.totalorder %s111, %s113
      %p117 = scmp.eq.s32.totalorder %s25, 0
      %p118 = por %p116, %p117
      %p119 = scmp.ne.s32.totalorder %s111, %s113
      %p120 = scmp.eq.s32.totalorder %s30, 1
      %p121 = por %p119, %p120
      %p122 = scmp.ne.s32.totalorder %s113, %s114
      %p123 = scmp.eq.s32.totalorder %s30, 0
      %p124 = por %p122, %p123
      %p125 = scmp.ne.s32.totalorder %s113, %s114
      %p126 = scmp.eq.s32.totalorder %s31, 1
      %p127 = por %p125, %p126
      %p129 = scmp.ne.s32.totalorder %s114, %s128
      %p130 = scmp.eq.s32.totalorder %s31, 0
      %p131 = por %p129, %p130
      %s133 = sadd.s32 %s132, 1
      %p136 = scmp.eq.s32.totalorder %s25, 1
      %p137 = scmp.ne.s32.totalorder %s132, %s134
      %p138 = scmp.eq.s32.totalorder %s25, 0
      %p139 = por %p137, %p138
      %p140 = scmp.ne.s32.totalorder %s132, %s134
      %p141 = scmp.eq.s32.totalorder %s30, 1
      %p142 = por %p140, %p141
      %p143 = scmp.ne.s32.totalorder %s134, %s135
      %p144 = scmp.eq.s32.totalorder %s30, 0
      %p145 = por %p143, %p144
      %p146 = scmp.ne.s32.totalorder %s134, %s135
      %p147 = scmp.eq.s32.totalorder %s31, 1
      %p148 = por %p146, %p147
      %p150 = scmp.ne.s32.totalorder %s135, %s149
      %p151 = scmp.eq.s32.totalorder %s31, 0
      %p152 = por %p150, %p151
      %s154 = sadd.s32 %s153, 1
      %p157 = scmp.eq.s32.totalorder %s25, 1
      %p158 = scmp.ne.s32.totalorder %s153, %s155
      %p159 = scmp.eq.s32.totalorder %s25, 0
      %p160 = por %p158, %p159
      %p161 = scmp.ne.s32.totalorder %s153, %s155
      %p162 = scmp.eq.s32.totalorder %s30, 1
      %p163 = por %p161, %p162
      %p164 = scmp.ne.s32.totalorder %s155, %s156
      %p165 = scmp.eq.s32.totalorder %s30, 0
      %p166 = por %p164, %p165
      %p167 = scmp.ne.s32.totalorder %s155, %s156
      %p168 = scmp.eq.s32.totalorder %s31, 1
      %p169 = por %p167, %p168
      %p171 = scmp.ne.s32.totalorder %s156, %s170
      %p172 = scmp.eq.s32.totalorder %s31, 0
      %p173 = por %p171, %p172
      %s175 = sadd.s32 %s174, 1
      %p178 = scmp.eq.s32.totalorder %s25, 1
      %p179 = scmp.ne.s32.totalorder %s174, %s176
      %p180 = scmp.eq.s32.totalorder %s25, 0
      %p181 = por %p179, %p180
      %p182 = scmp.ne.s32.totalorder %s174, %s176
      %p183 = scmp.eq.s32.totalorder %s30, 1
      %p184 = por %p182, %p183
      %p185 = scmp.ne.s32.totalorder %s176, %s177
      %p186 = scmp.eq.s32.totalorder %s30, 0
      %p187 = por %p185, %p186
      %p188 = scmp.ne.s32.totalorder %s176, %s177
      %p189 = scmp.eq.s32.totalorder %s31, 1
      %p190 = por %p188, %p189
      %p192 = scmp.ne.s32.totalorder %s177, %s191
      %p193 = scmp.eq.s32.totalorder %s31, 0
      %p194 = por %p192, %p193
      %s196 = sadd.s32 %s195, 1
      %p199 = scmp.eq.s32.totalorder %s25, 1
      %p200 = scmp.ne.s32.totalorder %s195, %s197
      %p201 = scmp.eq.s32.totalorder %s25, 0
      %p202 = por %p200, %p201
      %p203 = scmp.ne.s32.totalorder %s195, %s197
      %p204 = scmp.eq.s32.totalorder %s30, 1
      %p205 = por %p203, %p204
      %p206 = scmp.ne.s32.totalorder %s197, %s198
      %p207 = scmp.eq.s32.totalorder %s30, 0
      %p208 = por %p206, %p207
      %p209 = scmp.ne.s32.totalorder %s197, %s198
      %p210 = scmp.eq.s32.totalorder %s31, 1
      %p211 = por %p209, %p210
      %p213 = scmp.ne.s32.totalorder %s198, %s212
      %p214 = scmp.eq.s32.totalorder %s31, 0
      %p215 = por %p213, %p214
      %s217 = sadd.s32 %s216, 1
      %p220 = scmp.eq.s32.totalorder %s25, 1
      %p221 = scmp.ne.s32.totalorder %s216, %s218
      %p222 = scmp.eq.s32.totalorder %s25, 0
      %p223 = por %p221, %p222
      %p224 = scmp.ne.s32.totalorder %s216, %s218
      %p225 = scmp.eq.s32.totalorder %s30, 1
      %p226 = por %p224, %p225
      %p227 = scmp.ne.s32.totalorder %s218, %s219
      %p228 = scmp.eq.s32.totalorder %s30, 0
      %p229 = por %p227, %p228
      %p230 = scmp.ne.s32.totalorder %s218, %s219
      %p231 = scmp.eq.s32.totalorder %s31, 1
      %p232 = por %p230, %p231
      %p234 = scmp.ne.s32.totalorder %s219, %s233
      %p235 = scmp.eq.s32.totalorder %s31, 0
      %p236 = por %p234, %p235
      %s238 = sadd.s32 %s237, 1
      %p241 = scmp.eq.s32.totalorder %s25, 1
      %p242 = scmp.ne.s32.totalorder %s237, %s239
      %p243 = scmp.eq.s32.totalorder %s25, 0
      %p244 = por %p242, %p243
      %p245 = scmp.ne.s32.totalorder %s237, %s239
      %p246 = scmp.eq.s32.totalorder %s30, 1
      %p247 = por %p245, %p246
      %p248 = scmp.ne.s32.totalorder %s239, %s240
      %p249 = scmp.eq.s32.totalorder %s30, 0
      %p250 = por %p248, %p249
      %p251 = scmp.ne.s32.totalorder %s239, %s240
      %p252 = scmp.eq.s32.totalorder %s31, 1
      %p253 = por %p251, %p252
      %p255 = scmp.ne.s32.totalorder %s240, %s254
      %p256 = scmp.eq.s32.totalorder %s31, 0
      %p257 = por %p255, %p256
      %s259 = sadd.s32 %s258, 1
      %p262 = scmp.eq.s32.totalorder %s25, 1
      %p263 = scmp.ne.s32.totalorder %s258, %s260
      %p264 = scmp.eq.s32.totalorder %s25, 0
      %p265 = por %p263, %p264
      %p266 = scmp.ne.s32.totalorder %s258, %s260
      %p267 = scmp.eq.s32.totalorder %s30, 1
      %p268 = por %p266, %p267
      %p269 = scmp.ne.s32.totalorder %s260, %s261
      %p270 = scmp.eq.s32.totalorder %s30, 0
      %p271 = por %p269, %p270
      %p272 = scmp.ne.s32.totalorder %s260, %s261
      %p273 = scmp.eq.s32.totalorder %s31, 1
      %p274 = por %p272, %p273
      %p276 = scmp.ne.s32.totalorder %s261, %s275
      %p277 = scmp.eq.s32.totalorder %s31, 0
      %p278 = por %p276, %p277
      %s279 = ssub.s32 %s25, %s32
      %p280 = scmp.eq.s32.totalorder %s279, 0
      %s282 = sadd.s32 %s281, 1
      %s283 = scalar_select %p280, %s281, %s282
      %p286 = pneg %p280
      %p287 = scmp.eq.s32.totalorder %s25, 1
      %p288 = por %p286, %p287
      %p289 = scmp.ne.s32.totalorder %s281, %s284
      %p290 = scmp.eq.s32.totalorder %s25, 0
      %p291 = por %p289, %p290
      %p292 = scmp.ne.s32.totalorder %s281, %s284
      %p293 = scmp.eq.s32.totalorder %s30, 1
      %p294 = por %p292, %p293
      %p295 = scmp.ne.s32.totalorder %s284, %s285
      %p296 = scmp.eq.s32.totalorder %s30, 0
      %p297 = por %p295, %p296
      %p298 = scmp.ne.s32.totalorder %s284, %s285
      %p299 = scmp.eq.s32.totalorder %s31, 1
      %p300 = por %p298, %p299
      %p302 = scmp.ne.s32.totalorder %s285, %s301
      %p303 = scmp.eq.s32.totalorder %s31, 0
      %p304 = por %p302, %p303
      %s305 = ssub.s32 %s25, %s32
      %p306 = scmp.eq.s32.totalorder %s305, 0
      %s308 = sadd.s32 %s307, 1
      %s309 = scalar_select %p306, %s307, %s308
      %p312 = pneg %p306
      %p313 = scmp.eq.s32.totalorder %s25, 1
      %p314 = por %p312, %p313
      %p315 = scmp.ne.s32.totalorder %s307, %s310
      %p316 = scmp.eq.s32.totalorder %s25, 0
      %p317 = por %p315, %p316
      %p318 = scmp.ne.s32.totalorder %s307, %s310
      %p319 = scmp.eq.s32.totalorder %s30, 1
      %p320 = por %p318, %p319
      %p321 = scmp.ne.s32.totalorder %s310, %s311
      %p322 = scmp.eq.s32.totalorder %s30, 0
      %p323 = por %p321, %p322
      %p324 = scmp.ne.s32.totalorder %s310, %s311
      %p325 = scmp.eq.s32.totalorder %s31, 1
      %p326 = por %p324, %p325
      %p328 = scmp.ne.s32.totalorder %s311, %s327
      %p329 = scmp.eq.s32.totalorder %s31, 0
      %p330 = por %p328, %p329
      %s331 = ssub.s32 %s25, %s32
      %p332 = scmp.eq.s32.totalorder %s331, 0
      %s334 = sadd.s32 %s333, 1
      %s335 = scalar_select %p332, %s333, %s334
      %p338 = pneg %p332
      %p339 = scmp.eq.s32.totalorder %s25, 1
      %p340 = por %p338, %p339
      %p341 = scmp.ne.s32.totalorder %s333, %s336
      %p342 = scmp.eq.s32.totalorder %s25, 0
      %p343 = por %p341, %p342
      %p344 = scmp.ne.s32.totalorder %s333, %s336
      %p345 = scmp.eq.s32.totalorder %s30, 1
      %p346 = por %p344, %p345
      %p347 = scmp.ne.s32.totalorder %s336, %s337
      %p348 = scmp.eq.s32.totalorder %s30, 0
      %p349 = por %p347, %p348
      %p350 = scmp.ne.s32.totalorder %s336, %s337
      %p351 = scmp.eq.s32.totalorder %s31, 1
      %p352 = por %p350, %p351
      %p354 = scmp.ne.s32.totalorder %s337, %s353
      %p355 = scmp.eq.s32.totalorder %s31, 0
      %p356 = por %p354, %p355
      %s357 = ssub.s32 %s25, %s32
      %p358 = scmp.eq.s32.totalorder %s357, 0
      %s360 = sadd.s32 %s359, 1
      %s361 = scalar_select %p358, %s359, %s360
      %p364 = pneg %p358
      %p365 = scmp.eq.s32.totalorder %s25, 1
      %p366 = por %p364, %p365
      %p367 = scmp.ne.s32.totalorder %s359, %s362
      %p368 = scmp.eq.s32.totalorder %s25, 0
      %p369 = por %p367, %p368
      %p370 = scmp.ne.s32.totalorder %s359, %s362
      %p371 = scmp.eq.s32.totalorder %s30, 1
      %p372 = por %p370, %p371
      %p373 = scmp.ne.s32.totalorder %s362, %s363
      %p374 = scmp.eq.s32.totalorder %s30, 0
      %p375 = por %p373, %p374
      %p376 = scmp.ne.s32.totalorder %s362, %s363
      %p377 = scmp.eq.s32.totalorder %s31, 1
      %p378 = por %p376, %p377
      %p380 = scmp.ne.s32.totalorder %s363, %s379
      %p381 = scmp.eq.s32.totalorder %s31, 0
      %p382 = por %p380, %p381
      %s383 = ssub.s32 %s25, %s32
      %p384 = scmp.eq.s32.totalorder %s383, 0
      %s386 = sadd.s32 %s385, 1
      %s387 = scalar_select %p384, %s385, %s386
      %p390 = pneg %p384
      %p391 = scmp.eq.s32.totalorder %s25, 1
      %p392 = por %p390, %p391
      %p393 = scmp.ne.s32.totalorder %s385, %s388
      %p394 = scmp.eq.s32.totalorder %s25, 0
      %p395 = por %p393, %p394
      %p396 = scmp.ne.s32.totalorder %s385, %s388
      %p397 = scmp.eq.s32.totalorder %s30, 1
      %p398 = por %p396, %p397
      %p399 = scmp.ne.s32.totalorder %s388, %s389
      %p400 = scmp.eq.s32.totalorder %s30, 0
      %p401 = por %p399, %p400
      %p402 = scmp.ne.s32.totalorder %s388, %s389
      %p403 = scmp.eq.s32.totalorder %s31, 1
      %p404 = por %p402, %p403
      %p406 = scmp.ne.s32.totalorder %s389, %s405
      %p407 = scmp.eq.s32.totalorder %s31, 0
      %p408 = por %p406, %p407
      %p409 = scmp.le.s32.totalorder 1, %s25
      %p410 = scmp.lt.s32.totalorder %s25, 3
      %p411 = pnand %p409, %p410
      %p412 = pneg %p411
      // Predicated region
      $region9: #{deformable_mha_forward.1} parent=5 // pred_check
        _
      $region10: #{deformable_mha_forward.1} parent=5 // pred_check_branch
        %414 = sbr.rel (%p411) target = $region12
      $region11: #{deformable_mha_forward.1} parent=5 // pred_region
        %s415 = ssub.s32 %s25, 1
        // Predicated region
        $region13: #{deformable_mha_forward.1} parent=11 // pred_check
          %p416 = pneg %p124
        $region14: #{deformable_mha_forward.1} parent=11 // pred_check_branch
          %418 = sbr.rel (%p416) target = $region16
        $region15: #{deformable_mha_forward.1} parent=11 // pred_region
          _
        $region16: #{deformable_mha_forward.1} parent=11 // pred_fallthru
          _
        // Predicated region
        $region17: #{deformable_mha_forward.1} parent=11 // pred_check
          %p419 = pneg %p145
        $region18: #{deformable_mha_forward.1} parent=11 // pred_check_branch
          %421 = sbr.rel (%p419) target = $region20
        $region19: #{deformable_mha_forward.1} parent=11 // pred_region
          _
        $region20: #{deformable_mha_forward.1} parent=11 // pred_fallthru
          _
        // Predicated region
        $region21: #{deformable_mha_forward.1} parent=11 // pred_check
          %p422 = pneg %p166
        $region22: #{deformable_mha_forward.1} parent=11 // pred_check_branch
          %424 = sbr.rel (%p422) target = $region24
        $region23: #{deformable_mha_forward.1} parent=11 // pred_region
          _
        $region24: #{deformable_mha_forward.1} parent=11 // pred_fallthru
          _
        // Predicated region
        $region25: #{deformable_mha_forward.1} parent=11 // pred_check
          %p425 = pneg %p187
        $region26: #{deformable_mha_forward.1} parent=11 // pred_check_branch
          %427 = sbr.rel (%p425) target = $region28
        $region27: #{deformable_mha_forward.1} parent=11 // pred_region
          _
        $region28: #{deformable_mha_forward.1} parent=11 // pred_fallthru
          _
        // Predicated region
        $region29: #{deformable_mha_forward.1} parent=11 // pred_check
          %p428 = pneg %p208
        $region30: #{deformable_mha_forward.1} parent=11 // pred_check_branch
          %430 = sbr.rel (%p428) target = $region32
        $region31: #{deformable_mha_forward.1} parent=11 // pred_region
          _
        $region32: #{deformable_mha_forward.1} parent=11 // pred_fallthru
          _
        // Predicated region
        $region33: #{deformable_mha_forward.1} parent=11 // pred_check
          %p431 = pneg %p229
        $region34: #{deformable_mha_forward.1} parent=11 // pred_check_branch
          %433 = sbr.rel (%p431) target = $region36
        $region35: #{deformable_mha_forward.1} parent=11 // pred_region
          _
        $region36: #{deformable_mha_forward.1} parent=11 // pred_fallthru
          _
        // Predicated region
        $region37: #{deformable_mha_forward.1} parent=11 // pred_check
          %p434 = pneg %p250
        $region38: #{deformable_mha_forward.1} parent=11 // pred_check_branch
          %436 = sbr.rel (%p434) target = $region40
        $region39: #{deformable_mha_forward.1} parent=11 // pred_region
          _
        $region40: #{deformable_mha_forward.1} parent=11 // pred_fallthru
          _
        // Predicated region
        $region41: #{deformable_mha_forward.1} parent=11 // pred_check
          %p437 = pneg %p271
        $region42: #{deformable_mha_forward.1} parent=11 // pred_check_branch
          %439 = sbr.rel (%p437) target = $region44
        $region43: #{deformable_mha_forward.1} parent=11 // pred_region
          _
        $region44: #{deformable_mha_forward.1} parent=11 // pred_fallthru
          _
      $region12: #{deformable_mha_forward.1} parent=5 // pred_fallthru
        _
      %p440 = scmp.lt.s32.totalorder %s25, 2
      // Predicated region
      $region45: #{deformable_mha_forward.1} parent=5 // pred_check
        %p441 = pneg %p440
      $region46: #{deformable_mha_forward.1} parent=5 // pred_check_branch
        %443 = sbr.rel (%p441) target = $region48
      $region47: #{deformable_mha_forward.1} parent=5 // pred_region
        // Predicated region
        $region49: #{deformable_mha_forward.1} parent=47 // pred_check
          %p444 = pneg %p45
        $region50: #{deformable_mha_forward.1} parent=47 // pred_check_branch
          %446 = sbr.rel (%p444) target = $region52
        $region51: #{deformable_mha_forward.1} parent=47 // pred_region
          %s447 = smul.u32 16, %s25
          %p448 = scmp.lt.s32.totalorder %s447, 31
          %s449 = scalar_select %p448, %s447, 31
          %s450 = smul.addr %s449, 4
          %s451 = scalar_lea.vmem %s0, %s450
          %s452 = smul.u32 16, %s25
        $region52: #{deformable_mha_forward.1} parent=47 // pred_fallthru
          _
        // Predicated region
        $region53: #{deformable_mha_forward.1} parent=47 // pred_check
          %p453 = pneg %p71
        $region54: #{deformable_mha_forward.1} parent=47 // pred_check_branch
          %455 = sbr.rel (%p453) target = $region56
        $region55: #{deformable_mha_forward.1} parent=47 // pred_region
          %s456 = smul.u32 16, %s25
          %p457 = scmp.lt.s32.totalorder %s456, 31
          %s458 = scalar_select %p457, %s456, 31
          %s459 = smul.addr %s458, 4
          %s460 = scalar_lea.vmem %s1, %s459
          %s461 = smul.u32 16, %s25
        $region56: #{deformable_mha_forward.1} parent=47 // pred_fallthru
          _
        // Predicated region
        $region57: #{deformable_mha_forward.1} parent=47 // pred_check
          %p462 = pneg %p97
        $region58: #{deformable_mha_forward.1} parent=47 // pred_check_branch
          %464 = sbr.rel (%p462) target = $region60
        $region59: #{deformable_mha_forward.1} parent=47 // pred_region
          %s465 = smul.u32 16, %s25
          %p466 = scmp.lt.s32.totalorder %s465, 31
          %s467 = scalar_select %p466, %s465, 31
          %s468 = smul.addr %s467, 4
          %s469 = scalar_lea.vmem %s2, %s468
          %s470 = smul.u32 16, %s25
        $region60: #{deformable_mha_forward.1} parent=47 // pred_fallthru
          _
      $region48: #{deformable_mha_forward.1} parent=5 // pred_fallthru
        _
      %p471 = scmp.le.s32.totalorder 1, %s25
      %p472 = scmp.lt.s32.totalorder %s25, 3
      %p473 = pnand %p471, %p472
      %p474 = pneg %p473
      // Predicated region
      $region61: #{deformable_mha_forward.1} parent=5 // pred_check
        _
      $region62: #{deformable_mha_forward.1} parent=5 // pred_check_branch
        %476 = sbr.rel (%p473) target = $region64
      $region63: #{deformable_mha_forward.1} parent=5 // pred_region
        %s477 = ssub.s32 %s25, 1
        %s478 = smul.u32 16, %s30
        %p479 = scmp.lt.s32.totalorder %s478, 31
        %s480 = scalar_select %p479, %s478, 31
        %s481 = smul.addr %s480, 4
        %s482 = scalar_lea.vmem %s0, %s481
        %p483 = pneg %p51
        %p484 = pneg %p48
        %s485 = smul.u32 16, %s30
        %p486 = scmp.lt.s32.totalorder %s485, 31
        %s487 = scalar_select %p486, %s485, 31
        %s488 = smul.addr %s487, 4
        %s489 = scalar_lea.vmem %s1, %s488
        %p490 = pneg %p77
        %p491 = pneg %p74
        %s492 = smul.u32 16, %s30
        %p493 = scmp.lt.s32.totalorder %s492, 31
        %s494 = scalar_select %p493, %s492, 31
        %s495 = smul.addr %s494, 4
        %s496 = scalar_lea.vmem %s2, %s495
        %p497 = pneg %p103
        %p498 = pneg %p100
        %p499 = pneg %p124
        %p500 = pneg %p121
        %p501 = pneg %p145
        %p502 = pneg %p142
        %p503 = pneg %p166
        %p504 = pneg %p163
        %p505 = pneg %p187
        %p506 = pneg %p184
        %p507 = pneg %p208
        %p508 = pneg %p205
        %p509 = pneg %p229
        %p510 = pneg %p226
        %p511 = pneg %p250
        %p512 = pneg %p247
        %p513 = pneg %p271
        %p514 = pneg %p268
        %p515 = pneg %p297
        %p516 = pneg %p294
        %s517 = sand.u32 %s284, 1
        %s518 = scalar_lea.sflag [#allocation3], %s517
        %s519 = sand.u32 %s284, 1
        %s520 = smul.addr %s519, 128
        %s521 = scalar_lea.vmem [#allocation2], %s520
        %p522 = pneg %p323
        %p523 = pneg %p320
        %s524 = smul.u32 16, %s30
        %p525 = scmp.lt.s32.totalorder %s524, 31
        %s526 = scalar_select %p525, %s524, 31
        %s527 = smul.addr %s526, 8
        %s528 = scalar_lea.vmem %s12, %s527
        %p529 = pneg %p349
        %p530 = pneg %p346
        %s531 = smul.u32 16, %s30
        %p532 = scmp.lt.s32.totalorder %s531, 31
        %s533 = scalar_select %p532, %s531, 31
        %s534 = smul.addr %s533, 8
        %s535 = scalar_lea.vmem %s13, %s534
        %p536 = pneg %p375
        %p537 = pneg %p372
        %s538 = smul.u32 16, %s30
        %p539 = scmp.lt.s32.totalorder %s538, 31
        %s540 = scalar_select %p539, %s538, 31
        %s541 = smul.addr %s540, 8
        %s542 = scalar_lea.vmem %s14, %s541
        %p543 = pneg %p401
        %p544 = pneg %p398
        %s545 = smul.u32 16, %s30
        %p546 = scmp.lt.s32.totalorder %s545, 31
        %s547 = scalar_select %p546, %s545, 31
        %s548 = smul.addr %s547, 8
        %s549 = scalar_lea.vmem %s15, %s548
        %s550 = smul.u32 16, %s30
        %p551 = scmp.lt.s32.totalorder %s550, 31
        %s552 = scalar_select %p551, %s550, 31
        %s553 = smul.addr %s552, 4
        %s554 = scalar_lea.vmem %s0, %s553
        %s555 = smul.u32 16, %s30
        %s556 = smul.u32 16, %s30
        %p557 = scmp.lt.s32.totalorder %s556, 31
        %s558 = scalar_select %p557, %s556, 31
        %s559 = smul.addr %s558, 4
        %s560 = scalar_lea.vmem %s1, %s559
        %s561 = smul.u32 16, %s30
        %s562 = smul.u32 16, %s30
        %p563 = scmp.lt.s32.totalorder %s562, 31
        %s564 = scalar_select %p563, %s562, 31
        %s565 = smul.addr %s564, 4
        %s566 = scalar_lea.vmem %s2, %s565
        %s567 = smul.u32 16, %s30
        %s568 = smul.u32 16, %s30
        %s569 = smul.u32 16, %s30
        %p570 = scmp.lt.s32.totalorder %s569, 31
        %s571 = scalar_select %p570, %s569, 31
        %s572 = smul.addr %s571, 8
        %s573 = scalar_lea.vmem %s12, %s572
        %s574 = smul.u32 16, %s30
        %s575 = smul.u32 16, %s30
        %p576 = scmp.lt.s32.totalorder %s575, 31
        %s577 = scalar_select %p576, %s575, 31
        %s578 = smul.addr %s577, 8
        %s579 = scalar_lea.vmem %s13, %s578
        %s580 = smul.u32 16, %s30
        %s581 = smul.u32 16, %s30
        %p582 = scmp.lt.s32.totalorder %s581, 31
        %s583 = scalar_select %p582, %s581, 31
        %s584 = smul.addr %s583, 8
        %s585 = scalar_lea.vmem %s14, %s584
        %s586 = smul.u32 16, %s30
        %s587 = smul.u32 16, %s30
        %p588 = scmp.lt.s32.totalorder %s587, 31
        %s589 = scalar_select %p588, %s587, 31
        %s590 = smul.addr %s589, 8
        %s591 = scalar_lea.vmem %s15, %s590
        %s592 = smul.u32 16, %s30
        %v594 = vld [vmem:[%s554] sm:$0xf]
        %v595 = vld [vmem:[%s554 + $0x4] sm:$0xf]
        %v596 = vld [vmem:[%s554 + $0x8] sm:$0xf]
        %v597 = vld [vmem:[%s554 + $0xc] sm:$0xf]
        %v598 = vld [vmem:[%s554 + $0x10] sm:$0xf]
        %v599 = vld [vmem:[%s554 + $0x14] sm:$0xf]
        %v600 = vld [vmem:[%s554 + $0x18] sm:$0xf]
        %v601 = vld [vmem:[%s554 + $0x1c] sm:$0xf]
        %v602 = vld [vmem:[%s554 + $0x20] sm:$0xf]
        %v603 = vld [vmem:[%s554 + $0x24] sm:$0xf]
        %v604 = vld [vmem:[%s554 + $0x28] sm:$0xf]
        %v605 = vld [vmem:[%s554 + $0x2c] sm:$0xf]
        %v606 = vld [vmem:[%s554 + $0x30] sm:$0xf]
        %v607 = vld [vmem:[%s554 + $0x34] sm:$0xf]
        %v608 = vld [vmem:[%s554 + $0x38] sm:$0xf]
        %v609 = vld [vmem:[%s554 + $0x3c] sm:$0xf]
        %v610 = vld [vmem:[%s560] sm:$0xf]
        %v611 = vld [vmem:[%s560 + $0x4] sm:$0xf]
        %v612 = vld [vmem:[%s560 + $0x8] sm:$0xf]
        %v613 = vld [vmem:[%s560 + $0xc] sm:$0xf]
        %v614 = vld [vmem:[%s560 + $0x10] sm:$0xf]
        %v615 = vld [vmem:[%s560 + $0x14] sm:$0xf]
        %v616 = vld [vmem:[%s560 + $0x18] sm:$0xf]
        %v617 = vld [vmem:[%s560 + $0x1c] sm:$0xf]
        %v618 = vld [vmem:[%s560 + $0x20] sm:$0xf]
        %v619 = vld [vmem:[%s560 + $0x24] sm:$0xf]
        %v620 = vld [vmem:[%s560 + $0x28] sm:$0xf]
        %v621 = vld [vmem:[%s560 + $0x2c] sm:$0xf]
        %v622 = vld [vmem:[%s560 + $0x30] sm:$0xf]
        %v623 = vld [vmem:[%s560 + $0x34] sm:$0xf]
        %v624 = vld [vmem:[%s560 + $0x38] sm:$0xf]
        %v625 = vld [vmem:[%s560 + $0x3c] sm:$0xf]
        %v626 = vld [vmem:[%s566] sm:$0xf]
        %v627 = vld [vmem:[%s566 + $0x4] sm:$0xf]
        %v628 = vld [vmem:[%s566 + $0x8] sm:$0xf]
        %v629 = vld [vmem:[%s566 + $0xc] sm:$0xf]
        %v630 = vld [vmem:[%s566 + $0x10] sm:$0xf]
        %v631 = vld [vmem:[%s566 + $0x14] sm:$0xf]
        %v632 = vld [vmem:[%s566 + $0x18] sm:$0xf]
        %v633 = vld [vmem:[%s566 + $0x1c] sm:$0xf]
        %v634 = vld [vmem:[%s566 + $0x20] sm:$0xf]
        %v635 = vld [vmem:[%s566 + $0x24] sm:$0xf]
        %v636 = vld [vmem:[%s566 + $0x28] sm:$0xf]
        %v637 = vld [vmem:[%s566 + $0x2c] sm:$0xf]
        %v638 = vld [vmem:[%s566 + $0x30] sm:$0xf]
        %v639 = vld [vmem:[%s566 + $0x34] sm:$0xf]
        %v640 = vld [vmem:[%s566 + $0x38] sm:$0xf]
        %v641 = vld [vmem:[%s566 + $0x3c] sm:$0xf]
        %v642 = vld [vmem:[%s3] sm:$0xf]
        %v643 = vld [vmem:[%s3 + $0x4] sm:$0xf]
        %v644 = vld [vmem:[%s3 + $0x8] sm:$0xf]
        %v645 = vld [vmem:[%s3 + $0xc] sm:$0xf]
        %v646 = vld [vmem:[%s3 + $0x10] sm:$0xf]
        %v647 = vld [vmem:[%s3 + $0x14] sm:$0xf]
        %v648 = vld [vmem:[%s3 + $0x18] sm:$0xf]
        %v649 = vld [vmem:[%s3 + $0x1c] sm:$0xf]
        %v650 = vld [vmem:[%s3 + $0x20] sm:$0xf]
        %v651 = vld [vmem:[%s3 + $0x24] sm:$0xf]
        %v652 = vld [vmem:[%s3 + $0x28] sm:$0xf]
        %v653 = vld [vmem:[%s3 + $0x2c] sm:$0xf]
        %v654 = vld [vmem:[%s3 + $0x30] sm:$0xf]
        %v655 = vld [vmem:[%s3 + $0x34] sm:$0xf]
        %v656 = vld [vmem:[%s3 + $0x38] sm:$0xf]
        %v657 = vld [vmem:[%s3 + $0x3c] sm:$0xf]
        %v658 = vld [vmem:[%s7] sm:$0x1]
        %v660 = vlaneseq
        %v661 = vshrl.u32 %v660, 7
        %v662 = vsub.s32 0, %v661
        %v663 = vrot.slane %v658, %v662
        %v681 = vunpack.c.l.b16 %v594
        %v682 = vunpack.c.l.b16 %v595
        %v683 = vunpack.c.l.b16 %v596
        %v684 = vunpack.c.l.b16 %v597
        %v685 = vunpack.c.l.b16 %v598
        %v686 = vunpack.c.l.b16 %v599
        %v687 = vunpack.c.l.b16 %v600
        %v688 = vunpack.c.l.b16 %v601
        %v689 = vunpack.c.l.b16 %v602
        %v690 = vunpack.c.l.b16 %v603
        %v691 = vunpack.c.l.b16 %v604
        %v692 = vunpack.c.l.b16 %v605
        %v693 = vunpack.c.l.b16 %v606
        %v694 = vunpack.c.l.b16 %v607
        %v695 = vunpack.c.l.b16 %v608
        %v696 = vunpack.c.l.b16 %v609
        %v697 = vpack.c.b16 %v682, %v681
        %v698 = vpack.c.b16 %v684, %v683
        %v699 = vpack.c.b16 %v686, %v685
        %v700 = vpack.c.b16 %v688, %v687
        %v701 = vpack.c.b16 %v690, %v689
        %v702 = vpack.c.b16 %v692, %v691
        %v703 = vpack.c.b16 %v694, %v693
        %v704 = vpack.c.b16 %v696, %v695
        %v729 = vunpack.c.l.b16 %v642
        %v730 = vunpack.c.l.b16 %v643
        %v731 = vunpack.c.l.b16 %v644
        %v732 = vunpack.c.l.b16 %v645
        %v733 = vunpack.c.l.b16 %v646
        %v734 = vunpack.c.l.b16 %v647
        %v735 = vunpack.c.l.b16 %v648
        %v736 = vunpack.c.l.b16 %v649
        %v737 = vunpack.c.l.b16 %v650
        %v738 = vunpack.c.l.b16 %v651
        %v739 = vunpack.c.l.b16 %v652
        %v740 = vunpack.c.l.b16 %v653
        %v741 = vunpack.c.l.b16 %v654
        %v742 = vunpack.c.l.b16 %v655
        %v743 = vunpack.c.l.b16 %v656
        %v744 = vunpack.c.l.b16 %v657
        %v745 = vpack.c.b16 %v730, %v729
        %v746 = vpack.c.b16 %v732, %v731
        %v747 = vpack.c.b16 %v734, %v733
        %v748 = vpack.c.b16 %v736, %v735
        %v749 = vpack.c.b16 %v738, %v737
        %v750 = vpack.c.b16 %v740, %v739
        %v751 = vpack.c.b16 %v742, %v741
        %v752 = vpack.c.b16 %v744, %v743
        %761 = vmatprep.subr.bf16.mxu0 0
        %762 = vmatpush1.bf16.msra.mxu0 %v745
        %763 = vmatprep.subr.bf16.mxu0 0
        %764 = vmatpush1.bf16.msra.mxu0 %v746
        %765 = vmatprep.subr.bf16.mxu0 0
        %766 = vmatpush1.bf16.msra.mxu0 %v747
        %767 = vmatprep.subr.bf16.mxu0 0
        %768 = vmatpush1.bf16.msra.mxu0 %v748
        %769 = vmatprep.subr.bf16.mxu0 0
        %770 = vmatpush1.bf16.msra.mxu0 %v749
        %771 = vmatprep.subr.bf16.mxu0 0
        %772 = vmatpush1.bf16.msra.mxu0 %v750
        %773 = vmatprep.subr.bf16.mxu0 0
        %774 = vmatpush1.bf16.msra.mxu0 %v751
        %775 = vmatprep.subr.bf16.mxu0 0
        %776 = vmatpush1.bf16.msra.mxu0 %v752
        %777 = vmatprep.subr.bf16.mxu0 0
        %778 = vmatpush1.bf16.msra.mxu0 0
        %779 = vmatprep.subr.bf16.mxu0 0
        %780 = vmatpush1.bf16.msra.mxu0 0
        %781 = vmatprep.subr.bf16.mxu0 0
        %782 = vmatpush1.bf16.msra.mxu0 0
        %783 = vmatprep.subr.bf16.mxu0 0
        %784 = vmatpush1.bf16.msra.mxu0 0
        %785 = vmatprep.subr.bf16.mxu0 0
        %786 = vmatpush1.bf16.msra.mxu0 0
        %787 = vmatprep.subr.bf16.mxu0 0
        %788 = vmatpush1.bf16.msra.mxu0 0
        %789 = vmatprep.subr.bf16.mxu0 0
        %790 = vmatpush1.bf16.msra.mxu0 0
        %791 = vmatprep.subr.bf16.mxu0 0
        %792 = vmatpush1.bf16.msra.mxu0 0
        %793 = vmatprep.mubr.bf16.mxu0 0
        %794 = vmatmul.mubr.bf16.gmra.mrb[0].mxu0 %v697
        %v795 = vpop.f32.mrb[0].mxu0
        %v796 = vadd.f32 %v663, %v795
        %v797 = vpop.f32.mrb[0].mxu0
        %v798 = vpop.f32.mrb[0].mxu0
        %v799 = vadd.f32 %v663, %v798
        %v800 = vpop.f32.mrb[0].mxu0
        %801 = vmatprep.mubr.bf16.mxu0 0
        %802 = vmatmul.mubr.bf16.gmra.mrb[0].mxu0 %v698
        %v803 = vpop.f32.mrb[0].mxu0
        %v804 = vadd.f32 %v663, %v803
        %v805 = vpop.f32.mrb[0].mxu0
        %v806 = vpop.f32.mrb[0].mxu0
        %v807 = vadd.f32 %v663, %v806
        %v808 = vpop.f32.mrb[0].mxu0
        %809 = vmatprep.mubr.bf16.mxu0 0
        %810 = vmatmul.mubr.bf16.gmra.mrb[0].mxu0 %v699
        %v811 = vpop.f32.mrb[0].mxu0
        %v812 = vadd.f32 %v663, %v811
        %v813 = vpop.f32.mrb[0].mxu0
        %v814 = vpop.f32.mrb[0].mxu0
        %v815 = vadd.f32 %v663, %v814
        %v816 = vpop.f32.mrb[0].mxu0
        %817 = vmatprep.mubr.bf16.mxu0 0
        %818 = vmatmul.mubr.bf16.gmra.mrb[0].mxu0 %v700
        %v819 = vpop.f32.mrb[0].mxu0
        %v820 = vadd.f32 %v663, %v819
        %v821 = vpop.f32.mrb[0].mxu0
        %v822 = vpop.f32.mrb[0].mxu0
        %v823 = vadd.f32 %v663, %v822
        %v824 = vpop.f32.mrb[0].mxu0
        %825 = vmatprep.mubr.bf16.mxu0 0
        %826 = vmatmul.mubr.bf16.gmra.mrb[0].mxu0 %v701
        %v827 = vpop.f32.mrb[0].mxu0
        %v828 = vadd.f32 %v663, %v827
        %v829 = vpop.f32.mrb[0].mxu0
        %v830 = vpop.f32.mrb[0].mxu0
        %v831 = vadd.f32 %v663, %v830
        %v832 = vpop.f32.mrb[0].mxu0
        %833 = vmatprep.mubr.bf16.mxu0 0
        %834 = vmatmul.mubr.bf16.gmra.mrb[0].mxu0 %v702
        %v835 = vpop.f32.mrb[0].mxu0
        %v836 = vadd.f32 %v663, %v835
        %v837 = vpop.f32.mrb[0].mxu0
        %v838 = vpop.f32.mrb[0].mxu0
        %v839 = vadd.f32 %v663, %v838
        %v840 = vpop.f32.mrb[0].mxu0
        %841 = vmatprep.mubr.bf16.mxu0 0
        %842 = vmatmul.mubr.bf16.gmra.mrb[0].mxu0 %v703
        %v843 = vpop.f32.mrb[0].mxu0
        %v844 = vadd.f32 %v663, %v843
        %v845 = vpop.f32.mrb[0].mxu0
        %v846 = vpop.f32.mrb[0].mxu0
        %v847 = vadd.f32 %v663, %v846
        %v848 = vpop.f32.mrb[0].mxu0
        %849 = vmatprep.mubr.bf16.mxu0 0
        %850 = vmatmul.mubr.bf16.gmra.mrb[0].mxu0 %v704
        %v851 = vpop.f32.mrb[0].mxu0
        %v852 = vadd.f32 %v663, %v851
        %v853 = vpop.f32.mrb[0].mxu0
        %v854 = vpop.f32.mrb[0].mxu0
        %v855 = vadd.f32 %v663, %v854
        %v856 = vpop.f32.mrb[0].mxu0
        %857 = vdwg.mxu0
        %858 = vst [vmem:[%s573] sm:$0xff] %v796
        %859 = vst [vmem:[%s573 + $0x8] sm:$0xff] %v799
        %860 = vst [vmem:[%s573 + $0x10] sm:$0xff] %v804
        %861 = vst [vmem:[%s573 + $0x18] sm:$0xff] %v807
        %862 = vst [vmem:[%s573 + $0x20] sm:$0xff] %v812
        %863 = vst [vmem:[%s573 + $0x28] sm:$0xff] %v815
        %864 = vst [vmem:[%s573 + $0x30] sm:$0xff] %v820
        %865 = vst [vmem:[%s573 + $0x38] sm:$0xff] %v823
        %866 = vst [vmem:[%s573 + $0x40] sm:$0xff] %v828
        %867 = vst [vmem:[%s573 + $0x48] sm:$0xff] %v831
        %868 = vst [vmem:[%s573 + $0x50] sm:$0xff] %v836
        %869 = vst [vmem:[%s573 + $0x58] sm:$0xff] %v839
        %870 = vst [vmem:[%s573 + $0x60] sm:$0xff] %v844
        %871 = vst [vmem:[%s573 + $0x68] sm:$0xff] %v847
        %872 = vst [vmem:[%s573 + $0x70] sm:$0xff] %v852
        %873 = vst [vmem:[%s573 + $0x78] sm:$0xff] %v855
        %v874 = vld [vmem:[%s4] sm:$0xf]
        %v875 = vld [vmem:[%s4 + $0x4] sm:$0xf]
        %v876 = vld [vmem:[%s4 + $0x8] sm:$0xf]
        %v877 = vld [vmem:[%s4 + $0xc] sm:$0xf]
        %v878 = vld [vmem:[%s4 + $0x10] sm:$0xf]
        %v879 = vld [vmem:[%s4 + $0x14] sm:$0xf]
        %v880 = vld [vmem:[%s4 + $0x18] sm:$0xf]
        %v881 = vld [vmem:[%s4 + $0x1c] sm:$0xf]
        %v882 = vld [vmem:[%s4 + $0x20] sm:$0xf]
        %v883 = vld [vmem:[%s4 + $0x24] sm:$0xf]
        %v884 = vld [vmem:[%s4 + $0x28] sm:$0xf]
        %v885 = vld [vmem:[%s4 + $0x2c] sm:$0xf]
        %v886 = vld [vmem:[%s4 + $0x30] sm:$0xf]
        %v887 = vld [vmem:[%s4 + $0x34] sm:$0xf]
        %v888 = vld [vmem:[%s4 + $0x38] sm:$0xf]
        %v889 = vld [vmem:[%s4 + $0x3c] sm:$0xf]
        %v890 = vld [vmem:[%s8] sm:$0x1]
        %v892 = vlaneseq
        %v893 = vshrl.u32 %v892, 7
        %v894 = vsub.s32 0, %v893
        %v895 = vrot.slane %v890, %v894
        %v913 = vunpack.c.l.b16 %v610
        %v914 = vunpack.c.l.b16 %v611
        %v915 = vunpack.c.l.b16 %v612
        %v916 = vunpack.c.l.b16 %v613
        %v917 = vunpack.c.l.b16 %v614
        %v918 = vunpack.c.l.b16 %v615
        %v919 = vunpack.c.l.b16 %v616
        %v920 = vunpack.c.l.b16 %v617
        %v921 = vunpack.c.l.b16 %v618
        %v922 = vunpack.c.l.b16 %v619
        %v923 = vunpack.c.l.b16 %v620
        %v924 = vunpack.c.l.b16 %v621
        %v925 = vunpack.c.l.b16 %v622
        %v926 = vunpack.c.l.b16 %v623
        %v927 = vunpack.c.l.b16 %v624
        %v928 = vunpack.c.l.b16 %v625
        %v929 = vpack.c.b16 %v914, %v913
        %v930 = vpack.c.b16 %v916, %v915
        %v931 = vpack.c.b16 %v918, %v917
        %v932 = vpack.c.b16 %v920, %v919
        %v933 = vpack.c.b16 %v922, %v921
        %v934 = vpack.c.b16 %v924, %v923
        %v935 = vpack.c.b16 %v926, %v925
        %v936 = vpack.c.b16 %v928, %v927
        %v961 = vunpack.c.l.b16 %v874
        %v962 = vunpack.c.l.b16 %v875
        %v963 = vunpack.c.l.b16 %v876
        %v964 = vunpack.c.l.b16 %v877
        %v965 = vunpack.c.l.b16 %v878
        %v966 = vunpack.c.l.b16 %v879
        %v967 = vunpack.c.l.b16 %v880
        %v968 = vunpack.c.l.b16 %v881
        %v969 = vunpack.c.l.b16 %v882
        %v970 = vunpack.c.l.b16 %v883
        %v971 = vunpack.c.l.b16 %v884
        %v972 = vunpack.c.l.b16 %v885
        %v973 = vunpack.c.l.b16 %v886
        %v974 = vunpack.c.l.b16 %v887
        %v975 = vunpack.c.l.b16 %v888
        %v976 = vunpack.c.l.b16 %v889
        %v977 = vpack.c.b16 %v962, %v961
        %v978 = vpack.c.b16 %v964, %v963
        %v979 = vpack.c.b16 %v966, %v965
        %v980 = vpack.c.b16 %v968, %v967
        %v981 = vpack.c.b16 %v970, %v969
        %v982 = vpack.c.b16 %v972, %v971
        %v983 = vpack.c.b16 %v974, %v973
        %v984 = vpack.c.b16 %v976, %v975
        %993 = vmatprep.subr.bf16.mxu0 0
        %994 = vmatpush1.bf16.msra.mxu0 %v977
        %995 = vmatprep.subr.bf16.mxu0 0
        %996 = vmatpush1.bf16.msra.mxu0 %v978
        %997 = vmatprep.subr.bf16.mxu0 0
        %998 = vmatpush1.bf16.msra.mxu0 %v979
        %999 = vmatprep.subr.bf16.mxu0 0
        %1000 = vmatpush1.bf16.msra.mxu0 %v980
        %1001 = vmatprep.subr.bf16.mxu0 0
        %1002 = vmatpush1.bf16.msra.mxu0 %v981
        %1003 = vmatprep.subr.bf16.mxu0 0
        %1004 = vmatpush1.bf16.msra.mxu0 %v982
        %1005 = vmatprep.subr.bf16.mxu0 0
        %1006 = vmatpush1.bf16.msra.mxu0 %v983
        %1007 = vmatprep.subr.bf16.mxu0 0
        %1008 = vmatpush1.bf16.msra.mxu0 %v984
        %1009 = vmatprep.subr.bf16.mxu0 0
        %1010 = vmatpush1.bf16.msra.mxu0 0
        %1011 = vmatprep.subr.bf16.mxu0 0
        %1012 = vmatpush1.bf16.msra.mxu0 0
        %1013 = vmatprep.subr.bf16.mxu0 0
        %1014 = vmatpush1.bf16.msra.mxu0 0
        %1015 = vmatprep.subr.bf16.mxu0 0
        %1016 = vmatpush1.bf16.msra.mxu0 0
        %1017 = vmatprep.subr.bf16.mxu0 0
        %1018 = vmatpush1.bf16.msra.mxu0 0
        %1019 = vmatprep.subr.bf16.mxu0 0
        %1020 = vmatpush1.bf16.msra.mxu0 0
        %1021 = vmatprep.subr.bf16.mxu0 0
        %1022 = vmatpush1.bf16.msra.mxu0 0
        %1023 = vmatprep.subr.bf16.mxu0 0
        %1024 = vmatpush1.bf16.msra.mxu0 0
        %1025 = vmatprep.mubr.bf16.mxu0 0
        %1026 = vmatmul.mubr.bf16.gmra.mrb[0].mxu0 %v929
        %v1027 = vpop.f32.mrb[0].mxu0
        %v1028 = vadd.f32 %v895, %v1027
        %v1029 = vpop.f32.mrb[0].mxu0
        %v1030 = vpop.f32.mrb[0].mxu0
        %v1031 = vadd.f32 %v895, %v1030
        %v1032 = vpop.f32.mrb[0].mxu0
        %1033 = vmatprep.mubr.bf16.mxu0 0
        %1034 = vmatmul.mubr.bf16.gmra.mrb[0].mxu0 %v930
        %v1035 = vpop.f32.mrb[0].mxu0
        %v1036 = vadd.f32 %v895, %v1035
        %v1037 = vpop.f32.mrb[0].mxu0
        %v1038 = vpop.f32.mrb[0].mxu0
        %v1039 = vadd.f32 %v895, %v1038
        %v1040 = vpop.f32.mrb[0].mxu0
        %1041 = vmatprep.mubr.bf16.mxu0 0
        %1042 = vmatmul.mubr.bf16.gmra.mrb[0].mxu0 %v931
        %v1043 = vpop.f32.mrb[0].mxu0
        %v1044 = vadd.f32 %v895, %v1043
        %v1045 = vpop.f32.mrb[0].mxu0
        %v1046 = vpop.f32.mrb[0].mxu0
        %v1047 = vadd.f32 %v895, %v1046
        %v1048 = vpop.f32.mrb[0].mxu0
        %1049 = vmatprep.mubr.bf16.mxu0 0
        %1050 = vmatmul.mubr.bf16.gmra.mrb[0].mxu0 %v932
        %v1051 = vpop.f32.mrb[0].mxu0
        %v1052 = vadd.f32 %v895, %v1051
        %v1053 = vpop.f32.mrb[0].mxu0
        %v1054 = vpop.f32.mrb[0].mxu0
        %v1055 = vadd.f32 %v895, %v1054
        %v1056 = vpop.f32.mrb[0].mxu0
        %1057 = vmatprep.mubr.bf16.mxu0 0
        %1058 = vmatmul.mubr.bf16.gmra.mrb[0].mxu0 %v933
        %v1059 = vpop.f32.mrb[0].mxu0
        %v1060 = vadd.f32 %v895, %v1059
        %v1061 = vpop.f32.mrb[0].mxu0
        %v1062 = vpop.f32.mrb[0].mxu0
        %v1063 = vadd.f32 %v895, %v1062
        %v1064 = vpop.f32.mrb[0].mxu0
        %1065 = vmatprep.mubr.bf16.mxu0 0
        %1066 = vmatmul.mubr.bf16.gmra.mrb[0].mxu0 %v934
        %v1067 = vpop.f32.mrb[0].mxu0
        %v1068 = vadd.f32 %v895, %v1067
        %v1069 = vpop.f32.mrb[0].mxu0
        %v1070 = vpop.f32.mrb[0].mxu0
        %v1071 = vadd.f32 %v895, %v1070
        %v1072 = vpop.f32.mrb[0].mxu0
        %1073 = vmatprep.mubr.bf16.mxu0 0
        %1074 = vmatmul.mubr.bf16.gmra.mrb[0].mxu0 %v935
        %v1075 = vpop.f32.mrb[0].mxu0
        %v1076 = vadd.f32 %v895, %v1075
        %v1077 = vpop.f32.mrb[0].mxu0
        %v1078 = vpop.f32.mrb[0].mxu0
        %v1079 = vadd.f32 %v895, %v1078
        %v1080 = vpop.f32.mrb[0].mxu0
        %1081 = vmatprep.mubr.bf16.mxu0 0
        %1082 = vmatmul.mubr.bf16.gmra.mrb[0].mxu0 %v936
        %v1083 = vpop.f32.mrb[0].mxu0
        %v1084 = vadd.f32 %v895, %v1083
        %v1085 = vpop.f32.mrb[0].mxu0
        %v1086 = vpop.f32.mrb[0].mxu0
        %v1087 = vadd.f32 %v895, %v1086
        %v1088 = vpop.f32.mrb[0].mxu0
        %1089 = vdwg.mxu0
        %1090 = vst [vmem:[%s579] sm:$0xff] %v1028
        %1091 = vst [vmem:[%s579 + $0x8] sm:$0xff] %v1031
        %1092 = vst [vmem:[%s579 + $0x10] sm:$0xff] %v1036
        %1093 = vst [vmem:[%s579 + $0x18] sm:$0xff] %v1039
        %1094 = vst [vmem:[%s579 + $0x20] sm:$0xff] %v1044
        %1095 = vst [vmem:[%s579 + $0x28] sm:$0xff] %v1047
        %1096 = vst [vmem:[%s579 + $0x30] sm:$0xff] %v1052
        %1097 = vst [vmem:[%s579 + $0x38] sm:$0xff] %v1055
        %1098 = vst [vmem:[%s579 + $0x40] sm:$0xff] %v1060
        %1099 = vst [vmem:[%s579 + $0x48] sm:$0xff] %v1063
        %1100 = vst [vmem:[%s579 + $0x50] sm:$0xff] %v1068
        %1101 = vst [vmem:[%s579 + $0x58] sm:$0xff] %v1071
        %1102 = vst [vmem:[%s579 + $0x60] sm:$0xff] %v1076
        %1103 = vst [vmem:[%s579 + $0x68] sm:$0xff] %v1079
        %1104 = vst [vmem:[%s579 + $0x70] sm:$0xff] %v1084
        %1105 = vst [vmem:[%s579 + $0x78] sm:$0xff] %v1087
        %v1106 = vld [vmem:[%s5] sm:$0xf]
        %v1107 = vld [vmem:[%s5 + $0x4] sm:$0xf]
        %v1108 = vld [vmem:[%s5 + $0x8] sm:$0xf]
        %v1109 = vld [vmem:[%s5 + $0xc] sm:$0xf]
        %v1110 = vld [vmem:[%s5 + $0x10] sm:$0xf]
        %v1111 = vld [vmem:[%s5 + $0x14] sm:$0xf]
        %v1112 = vld [vmem:[%s5 + $0x18] sm:$0xf]
        %v1113 = vld [vmem:[%s5 + $0x1c] sm:$0xf]
        %v1114 = vld [vmem:[%s5 + $0x20] sm:$0xf]
        %v1115 = vld [vmem:[%s5 + $0x24] sm:$0xf]
        %v1116 = vld [vmem:[%s5 + $0x28] sm:$0xf]
        %v1117 = vld [vmem:[%s5 + $0x2c] sm:$0xf]
        %v1118 = vld [vmem:[%s5 + $0x30] sm:$0xf]
        %v1119 = vld [vmem:[%s5 + $0x34] sm:$0xf]
        %v1120 = vld [vmem:[%s5 + $0x38] sm:$0xf]
        %v1121 = vld [vmem:[%s5 + $0x3c] sm:$0xf]
        %v1122 = vld [vmem:[%s9] sm:$0x1]
        %v1124 = vlaneseq
        %v1125 = vshrl.u32 %v1124, 7
        %v1126 = vsub.s32 0, %v1125
        %v1127 = vrot.slane %v1122, %v1126
        %v1145 = vunpack.c.l.b16 %v626
        %v1146 = vunpack.c.l.b16 %v627
        %v1147 = vunpack.c.l.b16 %v628
        %v1148 = vunpack.c.l.b16 %v629
        %v1149 = vunpack.c.l.b16 %v630
        %v1150 = vunpack.c.l.b16 %v631
        %v1151 = vunpack.c.l.b16 %v632
        %v1152 = vunpack.c.l.b16 %v633
        %v1153 = vunpack.c.l.b16 %v634
        %v1154 = vunpack.c.l.b16 %v635
        %v1155 = vunpack.c.l.b16 %v636
        %v1156 = vunpack.c.l.b16 %v637
        %v1157 = vunpack.c.l.b16 %v638
        %v1158 = vunpack.c.l.b16 %v639
        %v1159 = vunpack.c.l.b16 %v640
        %v1160 = vunpack.c.l.b16 %v641
        %v1161 = vpack.c.b16 %v1146, %v1145
        %v1162 = vpack.c.b16 %v1148, %v1147
        %v1163 = vpack.c.b16 %v1150, %v1149
        %v1164 = vpack.c.b16 %v1152, %v1151
        %v1165 = vpack.c.b16 %v1154, %v1153
        %v1166 = vpack.c.b16 %v1156, %v1155
        %v1167 = vpack.c.b16 %v1158, %v1157
        %v1168 = vpack.c.b16 %v1160, %v1159
        %v1193 = vunpack.c.l.b16 %v1106
        %v1194 = vunpack.c.l.b16 %v1107
        %v1195 = vunpack.c.l.b16 %v1108
        %v1196 = vunpack.c.l.b16 %v1109
        %v1197 = vunpack.c.l.b16 %v1110
        %v1198 = vunpack.c.l.b16 %v1111
        %v1199 = vunpack.c.l.b16 %v1112
        %v1200 = vunpack.c.l.b16 %v1113
        %v1201 = vunpack.c.l.b16 %v1114
        %v1202 = vunpack.c.l.b16 %v1115
        %v1203 = vunpack.c.l.b16 %v1116
        %v1204 = vunpack.c.l.b16 %v1117
        %v1205 = vunpack.c.l.b16 %v1118
        %v1206 = vunpack.c.l.b16 %v1119
        %v1207 = vunpack.c.l.b16 %v1120
        %v1208 = vunpack.c.l.b16 %v1121
        %v1209 = vpack.c.b16 %v1194, %v1193
        %v1210 = vpack.c.b16 %v1196, %v1195
        %v1211 = vpack.c.b16 %v1198, %v1197
        %v1212 = vpack.c.b16 %v1200, %v1199
        %v1213 = vpack.c.b16 %v1202, %v1201
        %v1214 = vpack.c.b16 %v1204, %v1203
        %v1215 = vpack.c.b16 %v1206, %v1205
        %v1216 = vpack.c.b16 %v1208, %v1207
        %1225 = vmatprep.subr.bf16.mxu0 0
        %1226 = vmatpush1.bf16.msra.mxu0 %v1209
        %1227 = vmatprep.subr.bf16.mxu0 0
        %1228 = vmatpush1.bf16.msra.mxu0 %v1210
        %1229 = vmatprep.subr.bf16.mxu0 0
        %1230 = vmatpush1.bf16.msra.mxu0 %v1211
        %1231 = vmatprep.subr.bf16.mxu0 0
        %1232 = vmatpush1.bf16.msra.mxu0 %v1212
        %1233 = vmatprep.subr.bf16.mxu0 0
        %1234 = vmatpush1.bf16.msra.mxu0 %v1213
        %1235 = vmatprep.subr.bf16.mxu0 0
        %1236 = vmatpush1.bf16.msra.mxu0 %v1214
        %1237 = vmatprep.subr.bf16.mxu0 0
        %1238 = vmatpush1.bf16.msra.mxu0 %v1215
        %1239 = vmatprep.subr.bf16.mxu0 0
        %1240 = vmatpush1.bf16.msra.mxu0 %v1216
        %1241 = vmatprep.subr.bf16.mxu0 0
        %1242 = vmatpush1.bf16.msra.mxu0 0
        %1243 = vmatprep.subr.bf16.mxu0 0
        %1244 = vmatpush1.bf16.msra.mxu0 0
        %1245 = vmatprep.subr.bf16.mxu0 0
        %1246 = vmatpush1.bf16.msra.mxu0 0
        %1247 = vmatprep.subr.bf16.mxu0 0
        %1248 = vmatpush1.bf16.msra.mxu0 0
        %1249 = vmatprep.subr.bf16.mxu0 0
        %1250 = vmatpush1.bf16.msra.mxu0 0
        %1251 = vmatprep.subr.bf16.mxu0 0
        %1252 = vmatpush1.bf16.msra.mxu0 0
        %1253 = vmatprep.subr.bf16.mxu0 0
        %1254 = vmatpush1.bf16.msra.mxu0 0
        %1255 = vmatprep.subr.bf16.mxu0 0
        %1256 = vmatpush1.bf16.msra.mxu0 0
        %1257 = vmatprep.mubr.bf16.mxu0 0
        %1258 = vmatmul.mubr.bf16.gmra.mrb[0].mxu0 %v1161
        %v1259 = vpop.f32.mrb[0].mxu0
        %v1260 = vadd.f32 %v1127, %v1259
        %v1261 = vpop.f32.mrb[0].mxu0
        %v1262 = vpop.f32.mrb[0].mxu0
        %v1263 = vadd.f32 %v1127, %v1262
        %v1264 = vpop.f32.mrb[0].mxu0
        %1265 = vmatprep.mubr.bf16.mxu0 0
        %1266 = vmatmul.mubr.bf16.gmra.mrb[0].mxu0 %v1162
        %v1267 = vpop.f32.mrb[0].mxu0
        %v1268 = vadd.f32 %v1127, %v1267
        %v1269 = vpop.f32.mrb[0].mxu0
        %v1270 = vpop.f32.mrb[0].mxu0
        %v1271 = vadd.f32 %v1127, %v1270
        %v1272 = vpop.f32.mrb[0].mxu0
        %1273 = vmatprep.mubr.bf16.mxu0 0
        %1274 = vmatmul.mubr.bf16.gmra.mrb[0].mxu0 %v1163
        %v1275 = vpop.f32.mrb[0].mxu0
        %v1276 = vadd.f32 %v1127, %v1275
        %v1277 = vpop.f32.mrb[0].mxu0
        %v1278 = vpop.f32.mrb[0].mxu0
        %v1279 = vadd.f32 %v1127, %v1278
        %v1280 = vpop.f32.mrb[0].mxu0
        %1281 = vmatprep.mubr.bf16.mxu0 0
        %1282 = vmatmul.mubr.bf16.gmra.mrb[0].mxu0 %v1164
        %v1283 = vpop.f32.mrb[0].mxu0
        %v1284 = vadd.f32 %v1127, %v1283
        %v1285 = vpop.f32.mrb[0].mxu0
        %v1286 = vpop.f32.mrb[0].mxu0
        %v1287 = vadd.f32 %v1127, %v1286
        %v1288 = vpop.f32.mrb[0].mxu0
        %1289 = vmatprep.mubr.bf16.mxu0 0
        %1290 = vmatmul.mubr.bf16.gmra.mrb[0].mxu0 %v1165
        %v1291 = vpop.f32.mrb[0].mxu0
        %v1292 = vadd.f32 %v1127, %v1291
        %v1293 = vpop.f32.mrb[0].mxu0
        %v1294 = vpop.f32.mrb[0].mxu0
        %v1295 = vadd.f32 %v1127, %v1294
        %v1296 = vpop.f32.mrb[0].mxu0
        %1297 = vmatprep.mubr.bf16.mxu0 0
        %1298 = vmatmul.mubr.bf16.gmra.mrb[0].mxu0 %v1166
        %v1299 = vpop.f32.mrb[0].mxu0
        %v1300 = vadd.f32 %v1127, %v1299
        %v1301 = vpop.f32.mrb[0].mxu0
        %v1302 = vpop.f32.mrb[0].mxu0
        %v1303 = vadd.f32 %v1127, %v1302
        %v1304 = vpop.f32.mrb[0].mxu0
        %1305 = vmatprep.mubr.bf16.mxu0 0
        %1306 = vmatmul.mubr.bf16.gmra.mrb[0].mxu0 %v1167
        %v1307 = vpop.f32.mrb[0].mxu0
        %v1308 = vadd.f32 %v1127, %v1307
        %v1309 = vpop.f32.mrb[0].mxu0
        %v1310 = vpop.f32.mrb[0].mxu0
        %v1311 = vadd.f32 %v1127, %v1310
        %v1312 = vpop.f32.mrb[0].mxu0
        %1313 = vmatprep.mubr.bf16.mxu0 0
        %1314 = vmatmul.mubr.bf16.gmra.mrb[0].mxu0 %v1168
        %v1315 = vpop.f32.mrb[0].mxu0
        %v1316 = vadd.f32 %v1127, %v1315
        %v1317 = vpop.f32.mrb[0].mxu0
        %v1318 = vpop.f32.mrb[0].mxu0
        %v1319 = vadd.f32 %v1127, %v1318
        %v1320 = vpop.f32.mrb[0].mxu0
        %1321 = vdwg.mxu0
        %1322 = vst [vmem:[%s585] sm:$0xff] %v1260
        %1323 = vst [vmem:[%s585 + $0x8] sm:$0xff] %v1263
        %1324 = vst [vmem:[%s585 + $0x10] sm:$0xff] %v1268
        %1325 = vst [vmem:[%s585 + $0x18] sm:$0xff] %v1271
        %1326 = vst [vmem:[%s585 + $0x20] sm:$0xff] %v1276
        %1327 = vst [vmem:[%s585 + $0x28] sm:$0xff] %v1279
        %1328 = vst [vmem:[%s585 + $0x30] sm:$0xff] %v1284
        %1329 = vst [vmem:[%s585 + $0x38] sm:$0xff] %v1287
        %1330 = vst [vmem:[%s585 + $0x40] sm:$0xff] %v1292
        %1331 = vst [vmem:[%s585 + $0x48] sm:$0xff] %v1295
        %1332 = vst [vmem:[%s585 + $0x50] sm:$0xff] %v1300
        %1333 = vst [vmem:[%s585 + $0x58] sm:$0xff] %v1303
        %1334 = vst [vmem:[%s585 + $0x60] sm:$0xff] %v1308
        %1335 = vst [vmem:[%s585 + $0x68] sm:$0xff] %v1311
        %1336 = vst [vmem:[%s585 + $0x70] sm:$0xff] %v1316
        %1337 = vst [vmem:[%s585 + $0x78] sm:$0xff] %v1319
        %v1338 = vld [vmem:[%s6] sm:$0xf]
        %v1339 = vld [vmem:[%s6 + $0x4] sm:$0xf]
        %v1340 = vld [vmem:[%s6 + $0x8] sm:$0xf]
        %v1341 = vld [vmem:[%s6 + $0xc] sm:$0xf]
        %v1342 = vld [vmem:[%s6 + $0x10] sm:$0xf]
        %v1343 = vld [vmem:[%s6 + $0x14] sm:$0xf]
        %v1344 = vld [vmem:[%s6 + $0x18] sm:$0xf]
        %v1345 = vld [vmem:[%s6 + $0x1c] sm:$0xf]
        %v1346 = vld [vmem:[%s6 + $0x20] sm:$0xf]
        %v1347 = vld [vmem:[%s6 + $0x24] sm:$0xf]
        %v1348 = vld [vmem:[%s6 + $0x28] sm:$0xf]
        %v1349 = vld [vmem:[%s6 + $0x2c] sm:$0xf]
        %v1350 = vld [vmem:[%s6 + $0x30] sm:$0xf]
        %v1351 = vld [vmem:[%s6 + $0x34] sm:$0xf]
        %v1352 = vld [vmem:[%s6 + $0x38] sm:$0xf]
        %v1353 = vld [vmem:[%s6 + $0x3c] sm:$0xf]
        %v1354 = vld [vmem:[%s10] sm:$0x1]
        %v1356 = vlaneseq
        %v1357 = vshrl.u32 %v1356, 7
        %v1358 = vsub.s32 0, %v1357
        %v1359 = vrot.slane %v1354, %v1358
        %v1377 = vunpack.c.l.b16 %v1338
        %v1378 = vunpack.c.l.b16 %v1339
        %v1379 = vunpack.c.l.b16 %v1340
        %v1380 = vunpack.c.l.b16 %v1341
        %v1381 = vunpack.c.l.b16 %v1342
        %v1382 = vunpack.c.l.b16 %v1343
        %v1383 = vunpack.c.l.b16 %v1344
        %v1384 = vunpack.c.l.b16 %v1345
        %v1385 = vunpack.c.l.b16 %v1346
        %v1386 = vunpack.c.l.b16 %v1347
        %v1387 = vunpack.c.l.b16 %v1348
        %v1388 = vunpack.c.l.b16 %v1349
        %v1389 = vunpack.c.l.b16 %v1350
        %v1390 = vunpack.c.l.b16 %v1351
        %v1391 = vunpack.c.l.b16 %v1352
        %v1392 = vunpack.c.l.b16 %v1353
        %v1393 = vpack.c.b16 %v1378, %v1377
        %v1394 = vpack.c.b16 %v1380, %v1379
        %v1395 = vpack.c.b16 %v1382, %v1381
        %v1396 = vpack.c.b16 %v1384, %v1383
        %v1397 = vpack.c.b16 %v1386, %v1385
        %v1398 = vpack.c.b16 %v1388, %v1387
        %v1399 = vpack.c.b16 %v1390, %v1389
        %v1400 = vpack.c.b16 %v1392, %v1391
        %1409 = vmatprep.subr.bf16.mxu0 0
        %1410 = vmatpush1.bf16.msra.mxu0 %v1393
        %1411 = vmatprep.subr.bf16.mxu0 0
        %1412 = vmatpush1.bf16.msra.mxu0 %v1394
        %1413 = vmatprep.subr.bf16.mxu0 0
        %1414 = vmatpush1.bf16.msra.mxu0 %v1395
        %1415 = vmatprep.subr.bf16.mxu0 0
        %1416 = vmatpush1.bf16.msra.mxu0 %v1396
        %1417 = vmatprep.subr.bf16.mxu0 0
        %1418 = vmatpush1.bf16.msra.mxu0 %v1397
        %1419 = vmatprep.subr.bf16.mxu0 0
        %1420 = vmatpush1.bf16.msra.mxu0 %v1398
        %1421 = vmatprep.subr.bf16.mxu0 0
        %1422 = vmatpush1.bf16.msra.mxu0 %v1399
        %1423 = vmatprep.subr.bf16.mxu0 0
        %1424 = vmatpush1.bf16.msra.mxu0 %v1400
        %1425 = vmatprep.subr.bf16.mxu0 0
        %1426 = vmatpush1.bf16.msra.mxu0 0
        %1427 = vmatprep.subr.bf16.mxu0 0
        %1428 = vmatpush1.bf16.msra.mxu0 0
        %1429 = vmatprep.subr.bf16.mxu0 0
        %1430 = vmatpush1.bf16.msra.mxu0 0
        %1431 = vmatprep.subr.bf16.mxu0 0
        %1432 = vmatpush1.bf16.msra.mxu0 0
        %1433 = vmatprep.subr.bf16.mxu0 0
        %1434 = vmatpush1.bf16.msra.mxu0 0
        %1435 = vmatprep.subr.bf16.mxu0 0
        %1436 = vmatpush1.bf16.msra.mxu0 0
        %1437 = vmatprep.subr.bf16.mxu0 0
        %1438 = vmatpush1.bf16.msra.mxu0 0
        %1439 = vmatprep.subr.bf16.mxu0 0
        %1440 = vmatpush1.bf16.msra.mxu0 0
        %1441 = vmatprep.mubr.bf16.mxu0 0
        %1442 = vmatmul.mubr.bf16.gmra.mrb[0].mxu0 %v697
        %v1443 = vpop.f32.mrb[0].mxu0
        %v1444 = vadd.f32 %v1359, %v1443
        %v1445 = vpop.f32.mrb[0].mxu0
        %v1446 = vpop.f32.mrb[0].mxu0
        %v1447 = vadd.f32 %v1359, %v1446
        %v1448 = vpop.f32.mrb[0].mxu0
        %1449 = vmatprep.mubr.bf16.mxu0 0
        %1450 = vmatmul.mubr.bf16.gmra.mrb[0].mxu0 %v698
        %v1451 = vpop.f32.mrb[0].mxu0
        %v1452 = vadd.f32 %v1359, %v1451
        %v1453 = vpop.f32.mrb[0].mxu0
        %v1454 = vpop.f32.mrb[0].mxu0
        %v1455 = vadd.f32 %v1359, %v1454
        %v1456 = vpop.f32.mrb[0].mxu0
        %1457 = vmatprep.mubr.bf16.mxu0 0
        %1458 = vmatmul.mubr.bf16.gmra.mrb[0].mxu0 %v699
        %v1459 = vpop.f32.mrb[0].mxu0
        %v1460 = vadd.f32 %v1359, %v1459
        %v1461 = vpop.f32.mrb[0].mxu0
        %v1462 = vpop.f32.mrb[0].mxu0
        %v1463 = vadd.f32 %v1359, %v1462
        %v1464 = vpop.f32.mrb[0].mxu0
        %1465 = vmatprep.mubr.bf16.mxu0 0
        %1466 = vmatmul.mubr.bf16.gmra.mrb[0].mxu0 %v700
        %v1467 = vpop.f32.mrb[0].mxu0
        %v1468 = vadd.f32 %v1359, %v1467
        %v1469 = vpop.f32.mrb[0].mxu0
        %v1470 = vpop.f32.mrb[0].mxu0
        %v1471 = vadd.f32 %v1359, %v1470
        %v1472 = vpop.f32.mrb[0].mxu0
        %1473 = vmatprep.mubr.bf16.mxu0 0
        %1474 = vmatmul.mubr.bf16.gmra.mrb[0].mxu0 %v701
        %v1475 = vpop.f32.mrb[0].mxu0
        %v1476 = vadd.f32 %v1359, %v1475
        %v1477 = vpop.f32.mrb[0].mxu0
        %v1478 = vpop.f32.mrb[0].mxu0
        %v1479 = vadd.f32 %v1359, %v1478
        %v1480 = vpop.f32.mrb[0].mxu0
        %1481 = vmatprep.mubr.bf16.mxu0 0
        %1482 = vmatmul.mubr.bf16.gmra.mrb[0].mxu0 %v702
        %v1483 = vpop.f32.mrb[0].mxu0
        %v1484 = vadd.f32 %v1359, %v1483
        %v1485 = vpop.f32.mrb[0].mxu0
        %v1486 = vpop.f32.mrb[0].mxu0
        %v1487 = vadd.f32 %v1359, %v1486
        %v1488 = vpop.f32.mrb[0].mxu0
        %1489 = vmatprep.mubr.bf16.mxu0 0
        %1490 = vmatmul.mubr.bf16.gmra.mrb[0].mxu0 %v703
        %v1491 = vpop.f32.mrb[0].mxu0
        %v1492 = vadd.f32 %v1359, %v1491
        %v1493 = vpop.f32.mrb[0].mxu0
        %v1494 = vpop.f32.mrb[0].mxu0
        %v1495 = vadd.f32 %v1359, %v1494
        %v1496 = vpop.f32.mrb[0].mxu0
        %1497 = vmatprep.mubr.bf16.mxu0 0
        %1498 = vmatmul.mubr.bf16.gmra.mrb[0].mxu0 %v704
        %v1499 = vpop.f32.mrb[0].mxu0
        %v1500 = vadd.f32 %v1359, %v1499
        %v1501 = vpop.f32.mrb[0].mxu0
        %v1502 = vpop.f32.mrb[0].mxu0
        %v1503 = vadd.f32 %v1359, %v1502
        %v1504 = vpop.f32.mrb[0].mxu0
        %1505 = vdwg.mxu0
        %vm1506 = vcmask 64512
        %1507 = vst.msk [vmem:[%s591] sm:$0xff] %vm1506, %v1444
        %1508 = vst.msk [vmem:[%s591 + $0x8] sm:$0xff] %vm1506, %v1447
        %1509 = vst.msk [vmem:[%s591 + $0x10] sm:$0xff] %vm1506, %v1452
        %1510 = vst.msk [vmem:[%s591 + $0x18] sm:$0xff] %vm1506, %v1455
        %1511 = vst.msk [vmem:[%s591 + $0x20] sm:$0xff] %vm1506, %v1460
        %1512 = vst.msk [vmem:[%s591 + $0x28] sm:$0xff] %vm1506, %v1463
        %1513 = vst.msk [vmem:[%s591 + $0x30] sm:$0xff] %vm1506, %v1468
        %1514 = vst.msk [vmem:[%s591 + $0x38] sm:$0xff] %vm1506, %v1471
        %1515 = vst.msk [vmem:[%s591 + $0x40] sm:$0xff] %vm1506, %v1476
        %1516 = vst.msk [vmem:[%s591 + $0x48] sm:$0xff] %vm1506, %v1479
        %1517 = vst.msk [vmem:[%s591 + $0x50] sm:$0xff] %vm1506, %v1484
        %1518 = vst.msk [vmem:[%s591 + $0x58] sm:$0xff] %vm1506, %v1487
        %1519 = vst.msk [vmem:[%s591 + $0x60] sm:$0xff] %vm1506, %v1492
        %1520 = vst.msk [vmem:[%s591 + $0x68] sm:$0xff] %vm1506, %v1495
        %1521 = vst.msk [vmem:[%s591 + $0x70] sm:$0xff] %vm1506, %v1500
        %1522 = vst.msk [vmem:[%s591 + $0x78] sm:$0xff] %vm1506, %v1503
        %1523 = vst [vmem:[%s521] sm:$0xff] 0.0
        %1524 = vst [vmem:[%s521 + $0x8] sm:$0xff] 0.0
        %1525 = vst [vmem:[%s521 + $0x10] sm:$0xff] 0.0
        %1526 = vst [vmem:[%s521 + $0x18] sm:$0xff] 0.0
        %1527 = vst [vmem:[%s521 + $0x20] sm:$0xff] 0.0
        %1528 = vst [vmem:[%s521 + $0x28] sm:$0xff] 0.0
        %1529 = vst [vmem:[%s521 + $0x30] sm:$0xff] 0.0
        %1530 = vst [vmem:[%s521 + $0x38] sm:$0xff] 0.0
        %1531 = vst [vmem:[%s521 + $0x40] sm:$0xff] 0.0
        %1532 = vst [vmem:[%s521 + $0x48] sm:$0xff] 0.0
        %1533 = vst [vmem:[%s521 + $0x50] sm:$0xff] 0.0
        %1534 = vst [vmem:[%s521 + $0x58] sm:$0xff] 0.0
        %1535 = vst [vmem:[%s521 + $0x60] sm:$0xff] 0.0
        %1536 = vst [vmem:[%s521 + $0x68] sm:$0xff] 0.0
        %1537 = vst [vmem:[%s521 + $0x70] sm:$0xff] 0.0
        %1538 = vst [vmem:[%s521 + $0x78] sm:$0xff] 0.0
        %s1539 = sand.u32 %s284, 1
        %s1540 = scalar_lea.sflag [#allocation3], %s1539
        %s1541 = sand.u32 %s284, 1
        %s1542 = smul.addr %s1541, 128
        %s1543 = scalar_lea.vmem [#allocation2], %s1542
        %s1544 = smul.u32 16, %s30
        %p1545 = scmp.lt.s32.totalorder %s1544, 31
        %s1546 = scalar_select %p1545, %s1544, 31
        %s1547 = smul.addr %s1546, 8
        %s1548 = scalar_lea.vmem %s12, %s1547
        %s1549 = smul.u32 16, %s30
        %p1550 = scmp.lt.s32.totalorder %s1549, 31
        %s1551 = scalar_select %p1550, %s1549, 31
        %s1552 = smul.addr %s1551, 8
        %s1553 = scalar_lea.vmem %s13, %s1552
        %s1554 = smul.u32 16, %s30
        %p1555 = scmp.lt.s32.totalorder %s1554, 31
        %s1556 = scalar_select %p1555, %s1554, 31
        %s1557 = smul.addr %s1556, 8
        %s1558 = scalar_lea.vmem %s14, %s1557
        %s1559 = smul.u32 16, %s30
        %p1560 = scmp.lt.s32.totalorder %s1559, 31
        %s1561 = scalar_select %p1560, %s1559, 31
        %s1562 = smul.addr %s1561, 8
        %s1563 = scalar_lea.vmem %s15, %s1562
        // Predicated region
        $region65: #{deformable_mha_forward.1} parent=63 // pred_check
          %p1564 = pneg %p294
        $region66: #{deformable_mha_forward.1} parent=63 // pred_check_branch
          %1566 = sbr.rel (%p1564) target = $region68
        $region67: #{deformable_mha_forward.1} parent=63 // pred_region
          %s1567 = smul.u32 16, %s30
          %s1569 = ssub.s32 2048, 2048
          %1570 = vsyncadd %s1540, %s1569
          %s1571 = smul.addr %s1567, 128
          %s1572 = scalar_lea.hbm %s11, %s1571
          %s1573 = sshll.u32 %s1543, 4
          %s1574 = int_to_ptr.vmem [resolvable:$true] %s1573
          %1579 = dma.vmem_to_hbm [thread:$0]  %s1574, 2048, %s1572, %s1540, 128, 128, 8
        $region68: #{deformable_mha_forward.1} parent=63 // pred_fallthru
          _
        // Predicated region
        $region69: #{deformable_mha_forward.1} parent=63 // pred_check
          %p1580 = pneg %p320
        $region70: #{deformable_mha_forward.1} parent=63 // pred_check_branch
          %1582 = sbr.rel (%p1580) target = $region72
        $region71: #{deformable_mha_forward.1} parent=63 // pred_region
          %s1583 = smul.u32 16, %s30
        $region72: #{deformable_mha_forward.1} parent=63 // pred_fallthru
          _
        // Predicated region
        $region73: #{deformable_mha_forward.1} parent=63 // pred_check
          %p1584 = pneg %p346
        $region74: #{deformable_mha_forward.1} parent=63 // pred_check_branch
          %1586 = sbr.rel (%p1584) target = $region76
        $region75: #{deformable_mha_forward.1} parent=63 // pred_region
          %s1587 = smul.u32 16, %s30
        $region76: #{deformable_mha_forward.1} parent=63 // pred_fallthru
          _
        // Predicated region
        $region77: #{deformable_mha_forward.1} parent=63 // pred_check
          %p1588 = pneg %p372
        $region78: #{deformable_mha_forward.1} parent=63 // pred_check_branch
          %1590 = sbr.rel (%p1588) target = $region80
        $region79: #{deformable_mha_forward.1} parent=63 // pred_region
          %s1591 = smul.u32 16, %s30
        $region80: #{deformable_mha_forward.1} parent=63 // pred_fallthru
          _
        // Predicated region
        $region81: #{deformable_mha_forward.1} parent=63 // pred_check
          %p1592 = pneg %p398
        $region82: #{deformable_mha_forward.1} parent=63 // pred_check_branch
          %1594 = sbr.rel (%p1592) target = $region84
        $region83: #{deformable_mha_forward.1} parent=63 // pred_region
          %s1595 = smul.u32 16, %s30
        $region84: #{deformable_mha_forward.1} parent=63 // pred_fallthru
          _
      $region64: #{deformable_mha_forward.1} parent=5 // pred_fallthru
        _
      %p1596 = scmp.le.s32.totalorder 2, %s25
      // Predicated region
      $region85: #{deformable_mha_forward.1} parent=5 // pred_check
        %p1597 = pneg %p1596
      $region86: #{deformable_mha_forward.1} parent=5 // pred_check_branch
        %1599 = sbr.rel (%p1597) target = $region88
      $region87: #{deformable_mha_forward.1} parent=5 // pred_region
        %s1600 = ssub.s32 %s25, 2
        // Predicated region
        $region89: #{deformable_mha_forward.1} parent=87 // pred_check
          %p1601 = pneg %p300
        $region90: #{deformable_mha_forward.1} parent=87 // pred_check_branch
          %1603 = sbr.rel (%p1601) target = $region92
        $region91: #{deformable_mha_forward.1} parent=87 // pred_region
          %s1604 = sand.u32 %s285, 1
          %s1605 = scalar_lea.sflag [#allocation3], %s1604
          %s1606 = sand.u32 %s285, 1
          %s1607 = smul.addr %s1606, 128
          %s1608 = scalar_lea.vmem [#allocation2], %s1607
          %1609 = dma.done %s1605, 2048
        $region92: #{deformable_mha_forward.1} parent=87 // pred_fallthru
          _
        // Predicated region
        $region93: #{deformable_mha_forward.1} parent=87 // pred_check
          %p1610 = pneg %p326
        $region94: #{deformable_mha_forward.1} parent=87 // pred_check_branch
          %1612 = sbr.rel (%p1610) target = $region96
        $region95: #{deformable_mha_forward.1} parent=87 // pred_region
          %s1613 = smul.u32 16, %s31
          %p1614 = scmp.lt.s32.totalorder %s1613, 31
          %s1615 = scalar_select %p1614, %s1613, 31
          %s1616 = smul.addr %s1615, 8
          %s1617 = scalar_lea.vmem %s12, %s1616
        $region96: #{deformable_mha_forward.1} parent=87 // pred_fallthru
          _
        // Predicated region
        $region97: #{deformable_mha_forward.1} parent=87 // pred_check
          %p1618 = pneg %p352
        $region98: #{deformable_mha_forward.1} parent=87 // pred_check_branch
          %1620 = sbr.rel (%p1618) target = $region100
        $region99: #{deformable_mha_forward.1} parent=87 // pred_region
          %s1621 = smul.u32 16, %s31
          %p1622 = scmp.lt.s32.totalorder %s1621, 31
          %s1623 = scalar_select %p1622, %s1621, 31
          %s1624 = smul.addr %s1623, 8
          %s1625 = scalar_lea.vmem %s13, %s1624
        $region100: #{deformable_mha_forward.1} parent=87 // pred_fallthru
          _
        // Predicated region
        $region101: #{deformable_mha_forward.1} parent=87 // pred_check
          %p1626 = pneg %p378
        $region102: #{deformable_mha_forward.1} parent=87 // pred_check_branch
          %1628 = sbr.rel (%p1626) target = $region104
        $region103: #{deformable_mha_forward.1} parent=87 // pred_region
          %s1629 = smul.u32 16, %s31
          %p1630 = scmp.lt.s32.totalorder %s1629, 31
          %s1631 = scalar_select %p1630, %s1629, 31
          %s1632 = smul.addr %s1631, 8
          %s1633 = scalar_lea.vmem %s14, %s1632
        $region104: #{deformable_mha_forward.1} parent=87 // pred_fallthru
          _
        // Predicated region
        $region105: #{deformable_mha_forward.1} parent=87 // pred_check
          %p1634 = pneg %p404
        $region106: #{deformable_mha_forward.1} parent=87 // pred_check_branch
          %1636 = sbr.rel (%p1634) target = $region108
        $region107: #{deformable_mha_forward.1} parent=87 // pred_region
          %s1637 = smul.u32 16, %s31
          %p1638 = scmp.lt.s32.totalorder %s1637, 31
          %s1639 = scalar_select %p1638, %s1637, 31
          %s1640 = smul.addr %s1639, 8
          %s1641 = scalar_lea.vmem %s15, %s1640
        $region108: #{deformable_mha_forward.1} parent=87 // pred_fallthru
          _
      $region88: #{deformable_mha_forward.1} parent=5 // pred_fallthru
        _
    $region6: #{deformable_mha_forward.1} parent=1 // loop_footer
      %s29 = sadd.s32 1, %s25
    $region7: #{deformable_mha_forward.1} parent=1 // loop_footer_branch
      %24 = sbr.rel target = $region3
    $region8: #{deformable_mha_forward.1} parent=1 // loop_exit
      _
    %1642 = vsyncpa [#allocation3], 1
    %s1643 = scalar_lea.sflag [#allocation3], 1
    %1644 = vsyncpa %s1643, 1

</llo_original>
